<compile_context>
chip_gen: v7x
topology: tpu7x:2x2x1
jax: 0.10.0
libtpu: 0.0.40
codegen_flags: <defaults>
</compile_context>

<pallas_src>
import jax
import jax.numpy as jnp
from jax.experimental import pallas as pl
from jax.experimental.pallas import tpu as pltpu


def _round_up(v, m):
    return (v + m - 1) // m * m


def _make_fused_kernel(H, W, Cin, Cout, Cin_p, Cout_p):
    Wp = W + 2
    N = H * Wp                                   # flat accumulator length
    offs = tuple(kh * Wp + kw for kh in range(3) for kw in range(3))

    def kernel(x_ref, w1_ref, b1_ref, w2_ref, b2_ref, mask_ref,
               o_ref, xp_ref, yp_ref, col_ref):
        # Zero the padded flat image scratches (cheap VMEM memset).
        xp_ref[...] = jnp.zeros_like(xp_ref)
        yp_ref[...] = jnp.zeros_like(yp_ref)

        # ---- padded + flattened layer-1 input: xp[c, (h+1)*Wp + (w+1)] = x[c,h,w]
        x2 = x_ref[0]                                          # (Cin, H*W)
        for h in range(H):
            dst = (h + 1) * Wp + 1
            xp_ref[0:Cin, dst:dst + W] = x2[:, h * W:(h + 1) * W]

        mask = mask_ref[...]                                   # (1, N), 1.0 on valid cols

        # ---- layer 1: im2col -> single MXU matmul -> bias -> ReLU ----------
        for t, off in enumerate(offs):
            col_ref[t * Cin_p:(t + 1) * Cin_p, :] = xp_ref[:, off:off + N]
        y1 = jnp.dot(w1_ref[...], col_ref[0:9 * Cin_p, :],
                     preferred_element_type=jnp.float32)       # (Cout, N)
        y1 = jnp.maximum(y1 + b1_ref[...], 0.0) * mask

        # One shifted store turns y1 into the zero-padded layer-2 input:
        # flat offset Wp+1 maps accumulator column h*Wp+w -> padded (h+1, w+1);
        # the masked-off columns land exactly on the zero padding columns.
        yp_ref[0:Cout, Wp + 1:Wp + 1 + N] = y1

        # ---- layer 2 --------------------------------------------------------
        for t, off in enumerate(offs):
            col_ref[t * Cout_p:(t + 1) * Cout_p, :] = yp_ref[:, off:off + N]
        y2 = jnp.dot(w2_ref[...], col_ref[0:9 * Cout_p, :],
                     preferred_element_type=jnp.float32)       # (Cout, N)
        y2 = jnp.maximum(y2 + b2_ref[...], 0.0)

        # ---- compact (drop the 2 pad columns per image row), lane-dense store
        for h in range(H):
            o_ref[0, :, h * W:(h + 1) * W] = y2[:, h * Wp:h * Wp + W]

    return kernel


def _flatten_conv_weight(w, cin_pad):
    """(Cout, Cin, 3, 3) -> (Cout, 9*cin_pad), tap-major, zero-padded channels."""
    cout, cin = w.shape[0], w.shape[1]
    w = jnp.transpose(w, (0, 2, 3, 1))                         # (Cout, 3, 3, Cin)
    if cin_pad != cin:
        w = jnp.pad(w, ((0, 0), (0, 0), (0, 0), (0, cin_pad - cin)))
    return w.reshape(cout, 9 * cin_pad)


def block_conv_forward(x_nchw, params):
    """Equivalent of Block_conv.forward.  x_nchw: (B, Cin, H, W) float32 (NCHW)."""
    w1, b1, w2, b2 = params
    B, Cin, H, W = x_nchw.shape
    Cout = w1.shape[0]
    Wp = W + 2
    N = H * Wp
    Lp = (H + 3) * Wp          # flat padded length + 1 extra zero row of headroom
    HW = H * W
    Cin_p = _round_up(Cin, 8)
    Cout_p = _round_up(Cout, 8)

    # Free reshapes / tiny weight reshuffles (no HBM pass over activations).
    x_flat = x_nchw.reshape(B, Cin, HW)
    w1f = _flatten_conv_weight(w1, Cin_p)                      # (Cout, 9*Cin_p)
    w2f = _flatten_conv_weight(w2, Cout_p)                     # (Cout, 9*Cout_p)
    b1c = b1.reshape(Cout, 1)
    b2c = b2.reshape(Cout, 1)
    # 1.0 on accumulator lanes that are real output columns ((q % Wp) < W).
    mask = ((jnp.arange(N, dtype=jnp.int32) % Wp) < W).astype(jnp.float32)
    mask = mask.reshape(1, N)

    kernel = _make_fused_kernel(H, W, Cin, Cout, Cin_p, Cout_p)

    flops = 2 * B * HW * 9 * (Cin * Cout + Cout * Cout)
    bytes_accessed = 4 * (B * Cin * HW + B * Cout * HW
                          + w1f.size + w2f.size + 2 * Cout + N)

    out_flat = pl.pallas_call(
        kernel,
        out_shape=jax.ShapeDtypeStruct((B, Cout, HW), jnp.float32),
        grid_spec=pltpu.PrefetchScalarGridSpec(
            num_scalar_prefetch=0,
            grid=(B,),
            in_specs=[
                pl.BlockSpec((1, Cin, HW), lambda b: (b, 0, 0)),       # x
                pl.BlockSpec((Cout, 9 * Cin_p), lambda b: (0, 0)),     # w1
                pl.BlockSpec((Cout, 1), lambda b: (0, 0)),             # b1
                pl.BlockSpec((Cout, 9 * Cout_p), lambda b: (0, 0)),    # w2
                pl.BlockSpec((Cout, 1), lambda b: (0, 0)),             # b2
                pl.BlockSpec((1, N), lambda b: (0, 0)),                # valid-col mask
            ],
            out_specs=pl.BlockSpec((1, Cout, HW), lambda b: (b, 0, 0)),
            scratch_shapes=[
                pltpu.VMEM((Cin_p, Lp), jnp.float32),                  # padded layer-1 input
                pltpu.VMEM((Cout_p, Lp), jnp.float32),                 # padded layer-1 output
                pltpu.VMEM((9 * max(Cin_p, Cout_p), N), jnp.float32),  # shared im2col
            ],
        ),
        compiler_params=pltpu.CompilerParams(
            dimension_semantics=("parallel",)),
        cost_estimate=pl.CostEstimate(
            flops=flops, transcendentals=0, bytes_accessed=bytes_accessed),
    )(x_flat, w1f, b1c, w2f, b2c, mask)

    return out_flat.reshape(B, Cout, H, W)


def init_params(key, in_channels, out_channels):
    # Deterministic synthetic init (shapes match nn.Conv2d defaults).
    k1, k2, k3, k4 = jax.random.split(key, 4)
    fan1 = in_channels * 9
    fan2 = out_channels * 9
    w1 = jax.random.uniform(k1, (out_channels, in_channels, 3, 3),
                            jnp.float32, -1.0, 1.0) / jnp.sqrt(fan1)
    b1 = jax.random.uniform(k2, (out_channels,), jnp.float32,
                            -1.0, 1.0) / jnp.sqrt(fan1)
    w2 = jax.random.uniform(k3, (out_channels, out_channels, 3, 3),
                            jnp.float32, -1.0, 1.0) / jnp.sqrt(fan2)
    b2 = jax.random.uniform(k4, (out_channels,), jnp.float32,
                            -1.0, 1.0) / jnp.sqrt(fan2)
    return (w1, b1, w2, b2)


if __name__ == "__main__":
    key = jax.random.PRNGKey(0)
    kx, kp = jax.random.split(key)

    B, Cin, Cout, H, W = 2, 4, 8, 16, 16
    x = jax.random.normal(kx, (B, Cin, H, W), jnp.float32)
    params = init_params(kp, Cin, Cout)

    out = block_conv_forward(x, params)
    jax.block_until_ready(out)
    assert out.shape == (B, Cout, H, W), out.shape

    # Cross-check against plain JAX conv (reference semantics of Block_conv).
    def ref(x, params):
        w1, b1, w2, b2 = params
        y = jax.lax.conv_general_dilated(
            x, w1, (1, 1), 'SAME',
            dimension_numbers=('NCHW', 'OIHW', 'NCHW')) + b1[None, :, None, None]
        y = jnp.maximum(y, 0.0)
        y = jax.lax.conv_general_dilated(
            y, w2, (1, 1), 'SAME',
            dimension_numbers=('NCHW', 'OIHW', 'NCHW')) + b2[None, :, None, None]
        return jnp.maximum(y, 0.0)

    out_ref = ref(x, params)
    assert jnp.allclose(out, out_ref, atol=2e-3, rtol=2e-3), (
        float(jnp.max(jnp.abs(out - out_ref))))

    print("KERNEL_OK")
</pallas_src>

<mosaic_0001>
module attributes {stable_mosaic.version = 11 : i64} {
  func.func @kernel(%arg0: i32, %arg1: memref<1x4x256xf32, #tpu.memory_space<vmem>>, %arg2: memref<8x72xf32, #tpu.memory_space<vmem>>, %arg3: memref<8x1xf32, #tpu.memory_space<vmem>>, %arg4: memref<8x72xf32, #tpu.memory_space<vmem>>, %arg5: memref<8x1xf32, #tpu.memory_space<vmem>>, %arg6: memref<1x288xf32, #tpu.memory_space<vmem>>, %arg7: memref<1x8x256xf32, #tpu.memory_space<vmem>>, %arg8: memref<8x342xf32, #tpu.memory_space<vmem>>, %arg9: memref<8x342xf32, #tpu.memory_space<vmem>>, %arg10: memref<72x288xf32, #tpu.memory_space<vmem>>) attributes {dimension_semantics = [#tpu.dimension_semantics<parallel>], iteration_bounds = array<i64: 2>, scalar_prefetch = 0 : i64, scratch_operands = 3 : i64, tpu.core_type = #tpu.core_type<tc>, window_params = [{transform_indices = @transform_0, window_bounds = array<i64: 1, 4, 256>}, {pipeline_mode = #tpu.pipeline_mode<synchronous>, transform_indices = @transform_1, window_bounds = array<i64: 8, 72>}, {pipeline_mode = #tpu.pipeline_mode<synchronous>, transform_indices = @transform_2, window_bounds = array<i64: 8, 1>}, {pipeline_mode = #tpu.pipeline_mode<synchronous>, transform_indices = @transform_3, window_bounds = array<i64: 8, 72>}, {pipeline_mode = #tpu.pipeline_mode<synchronous>, transform_indices = @transform_4, window_bounds = array<i64: 8, 1>}, {pipeline_mode = #tpu.pipeline_mode<synchronous>, transform_indices = @transform_5, window_bounds = array<i64: 1, 288>}, {transform_indices = @transform_6, window_bounds = array<i64: 1, 8, 256>}]} {
    %cst = arith.constant 0.000000e+00 : f32
    %0 = vector.broadcast %cst : f32 to vector<8x342xf32>
    %c0 = arith.constant 0 : index
    %c0_0 = arith.constant 0 : index
    %1 = vector.load %arg8[%c0, %c0_0] : memref<8x342xf32, #tpu.memory_space<vmem>>, vector<8x342xf32>
    tpu.vector_store %arg8[%c0, %c0_0], %0 {strides = array<i32>} : memref<8x342xf32, #tpu.memory_space<vmem>>, vector<8x342xf32>,
    %cst_1 = arith.constant 0.000000e+00 : f32
    %2 = vector.broadcast %cst_1 : f32 to vector<8x342xf32>
    %c0_2 = arith.constant 0 : index
    %c0_3 = arith.constant 0 : index
    %3 = vector.load %arg9[%c0_2, %c0_3] : memref<8x342xf32, #tpu.memory_space<vmem>>, vector<8x342xf32>
    tpu.vector_store %arg9[%c0_2, %c0_3], %2 {strides = array<i32>} : memref<8x342xf32, #tpu.memory_space<vmem>>, vector<8x342xf32>,
    %c0_4 = arith.constant 0 : index
    %c0_5 = arith.constant 0 : index
    %c0_6 = arith.constant 0 : index
    %4 = vector.load %arg1[%c0_4, %c0_5, %c0_6] : memref<1x4x256xf32, #tpu.memory_space<vmem>>, vector<1x4x256xf32>
    %5 = vector.shape_cast %4 : vector<1x4x256xf32> to vector<4x256xf32>
    %6 = vector.extract_strided_slice %5 {offsets = [0, 0], sizes = [4, 16], strides = [1, 1]} : vector<4x256xf32> to vector<4x16xf32>
    %c0_7 = arith.constant 0 : index
    %c19 = arith.constant 19 : index
    %7 = vector.load %arg8[%c0_7, %c19] : memref<8x342xf32, #tpu.memory_space<vmem>>, vector<4x16xf32>
    tpu.vector_store %arg8[%c0_7, %c19], %6 {strides = array<i32>} : memref<8x342xf32, #tpu.memory_space<vmem>>, vector<4x16xf32>,
    %8 = vector.extract_strided_slice %5 {offsets = [0, 16], sizes = [4, 16], strides = [1, 1]} : vector<4x256xf32> to vector<4x16xf32>
    %c0_8 = arith.constant 0 : index
    %c37 = arith.constant 37 : index
    %9 = vector.load %arg8[%c0_8, %c37] : memref<8x342xf32, #tpu.memory_space<vmem>>, vector<4x16xf32>
    tpu.vector_store %arg8[%c0_8, %c37], %8 {strides = array<i32>} : memref<8x342xf32, #tpu.memory_space<vmem>>, vector<4x16xf32>,
    %10 = vector.extract_strided_slice %5 {offsets = [0, 32], sizes = [4, 16], strides = [1, 1]} : vector<4x256xf32> to vector<4x16xf32>
    %c0_9 = arith.constant 0 : index
    %c55 = arith.constant 55 : index
    %11 = vector.load %arg8[%c0_9, %c55] : memref<8x342xf32, #tpu.memory_space<vmem>>, vector<4x16xf32>
    tpu.vector_store %arg8[%c0_9, %c55], %10 {strides = array<i32>} : memref<8x342xf32, #tpu.memory_space<vmem>>, vector<4x16xf32>,
    %12 = vector.extract_strided_slice %5 {offsets = [0, 48], sizes = [4, 16], strides = [1, 1]} : vector<4x256xf32> to vector<4x16xf32>
    %c0_10 = arith.constant 0 : index
    %c73 = arith.constant 73 : index
    %13 = vector.load %arg8[%c0_10, %c73] : memref<8x342xf32, #tpu.memory_space<vmem>>, vector<4x16xf32>
    tpu.vector_store %arg8[%c0_10, %c73], %12 {strides = array<i32>} : memref<8x342xf32, #tpu.memory_space<vmem>>, vector<4x16xf32>,
    %14 = vector.extract_strided_slice %5 {offsets = [0, 64], sizes = [4, 16], strides = [1, 1]} : vector<4x256xf32> to vector<4x16xf32>
    %c0_11 = arith.constant 0 : index
    %c91 = arith.constant 91 : index
    %15 = vector.load %arg8[%c0_11, %c91] : memref<8x342xf32, #tpu.memory_space<vmem>>, vector<4x16xf32>
    tpu.vector_store %arg8[%c0_11, %c91], %14 {strides = array<i32>} : memref<8x342xf32, #tpu.memory_space<vmem>>, vector<4x16xf32>,
    %16 = vector.extract_strided_slice %5 {offsets = [0, 80], sizes = [4, 16], strides = [1, 1]} : vector<4x256xf32> to vector<4x16xf32>
    %c0_12 = arith.constant 0 : index
    %c109 = arith.constant 109 : index
    %17 = vector.load %arg8[%c0_12, %c109] : memref<8x342xf32, #tpu.memory_space<vmem>>, vector<4x16xf32>
    tpu.vector_store %arg8[%c0_12, %c109], %16 {strides = array<i32>} : memref<8x342xf32, #tpu.memory_space<vmem>>, vector<4x16xf32>,
    %18 = vector.extract_strided_slice %5 {offsets = [0, 96], sizes = [4, 16], strides = [1, 1]} : vector<4x256xf32> to vector<4x16xf32>
    %c0_13 = arith.constant 0 : index
    %c127 = arith.constant 127 : index
    %19 = vector.load %arg8[%c0_13, %c127] : memref<8x342xf32, #tpu.memory_space<vmem>>, vector<4x16xf32>
    tpu.vector_store %arg8[%c0_13, %c127], %18 {strides = array<i32>} : memref<8x342xf32, #tpu.memory_space<vmem>>, vector<4x16xf32>,
    %20 = vector.extract_strided_slice %5 {offsets = [0, 112], sizes = [4, 16], strides = [1, 1]} : vector<4x256xf32> to vector<4x16xf32>
    %c0_14 = arith.constant 0 : index
    %c145 = arith.constant 145 : index
    %21 = vector.load %arg8[%c0_14, %c145] : memref<8x342xf32, #tpu.memory_space<vmem>>, vector<4x16xf32>
    tpu.vector_store %arg8[%c0_14, %c145], %20 {strides = array<i32>} : memref<8x342xf32, #tpu.memory_space<vmem>>, vector<4x16xf32>,
    %22 = vector.extract_strided_slice %5 {offsets = [0, 128], sizes = [4, 16], strides = [1, 1]} : vector<4x256xf32> to vector<4x16xf32>
    %c0_15 = arith.constant 0 : index
    %c163 = arith.constant 163 : index
    %23 = vector.load %arg8[%c0_15, %c163] : memref<8x342xf32, #tpu.memory_space<vmem>>, vector<4x16xf32>
    tpu.vector_store %arg8[%c0_15, %c163], %22 {strides = array<i32>} : memref<8x342xf32, #tpu.memory_space<vmem>>, vector<4x16xf32>,
    %24 = vector.extract_strided_slice %5 {offsets = [0, 144], sizes = [4, 16], strides = [1, 1]} : vector<4x256xf32> to vector<4x16xf32>
    %c0_16 = arith.constant 0 : index
    %c181 = arith.constant 181 : index
    %25 = vector.load %arg8[%c0_16, %c181] : memref<8x342xf32, #tpu.memory_space<vmem>>, vector<4x16xf32>
    tpu.vector_store %arg8[%c0_16, %c181], %24 {strides = array<i32>} : memref<8x342xf32, #tpu.memory_space<vmem>>, vector<4x16xf32>,
    %26 = vector.extract_strided_slice %5 {offsets = [0, 160], sizes = [4, 16], strides = [1, 1]} : vector<4x256xf32> to vector<4x16xf32>
    %c0_17 = arith.constant 0 : index
    %c199 = arith.constant 199 : index
    %27 = vector.load %arg8[%c0_17, %c199] : memref<8x342xf32, #tpu.memory_space<vmem>>, vector<4x16xf32>
    tpu.vector_store %arg8[%c0_17, %c199], %26 {strides = array<i32>} : memref<8x342xf32, #tpu.memory_space<vmem>>, vector<4x16xf32>,
    %28 = vector.extract_strided_slice %5 {offsets = [0, 176], sizes = [4, 16], strides = [1, 1]} : vector<4x256xf32> to vector<4x16xf32>
    %c0_18 = arith.constant 0 : index
    %c217 = arith.constant 217 : index
    %29 = vector.load %arg8[%c0_18, %c217] : memref<8x342xf32, #tpu.memory_space<vmem>>, vector<4x16xf32>
    tpu.vector_store %arg8[%c0_18, %c217], %28 {strides = array<i32>} : memref<8x342xf32, #tpu.memory_space<vmem>>, vector<4x16xf32>,
    %30 = vector.extract_strided_slice %5 {offsets = [0, 192], sizes = [4, 16], strides = [1, 1]} : vector<4x256xf32> to vector<4x16xf32>
    %c0_19 = arith.constant 0 : index
    %c235 = arith.constant 235 : index
    %31 = vector.load %arg8[%c0_19, %c235] : memref<8x342xf32, #tpu.memory_space<vmem>>, vector<4x16xf32>
    tpu.vector_store %arg8[%c0_19, %c235], %30 {strides = array<i32>} : memref<8x342xf32, #tpu.memory_space<vmem>>, vector<4x16xf32>,
    %32 = vector.extract_strided_slice %5 {offsets = [0, 208], sizes = [4, 16], strides = [1, 1]} : vector<4x256xf32> to vector<4x16xf32>
    %c0_20 = arith.constant 0 : index
    %c253 = arith.constant 253 : index
    %33 = vector.load %arg8[%c0_20, %c253] : memref<8x342xf32, #tpu.memory_space<vmem>>, vector<4x16xf32>
    tpu.vector_store %arg8[%c0_20, %c253], %32 {strides = array<i32>} : memref<8x342xf32, #tpu.memory_space<vmem>>, vector<4x16xf32>,
    %34 = vector.extract_strided_slice %5 {offsets = [0, 224], sizes = [4, 16], strides = [1, 1]} : vector<4x256xf32> to vector<4x16xf32>
    %c0_21 = arith.constant 0 : index
    %c271 = arith.constant 271 : index
    %35 = vector.load %arg8[%c0_21, %c271] : memref<8x342xf32, #tpu.memory_space<vmem>>, vector<4x16xf32>
    tpu.vector_store %arg8[%c0_21, %c271], %34 {strides = array<i32>} : memref<8x342xf32, #tpu.memory_space<vmem>>, vector<4x16xf32>,
    %36 = vector.extract_strided_slice %5 {offsets = [0, 240], sizes = [4, 16], strides = [1, 1]} : vector<4x256xf32> to vector<4x16xf32>
    %c0_22 = arith.constant 0 : index
    %c289 = arith.constant 289 : index
    %37 = vector.load %arg8[%c0_22, %c289] : memref<8x342xf32, #tpu.memory_space<vmem>>, vector<4x16xf32>
    tpu.vector_store %arg8[%c0_22, %c289], %36 {strides = array<i32>} : memref<8x342xf32, #tpu.memory_space<vmem>>, vector<4x16xf32>,
    %c0_23 = arith.constant 0 : index
    %c0_24 = arith.constant 0 : index
    %38 = vector.load %arg6[%c0_23, %c0_24] : memref<1x288xf32, #tpu.memory_space<vmem>>, vector<1x288xf32>
    %c0_25 = arith.constant 0 : index
    %c0_26 = arith.constant 0 : index
    %39 = vector.load %arg8[%c0_25, %c0_26] : memref<8x342xf32, #tpu.memory_space<vmem>>, vector<8x288xf32>
    %c0_27 = arith.constant 0 : index
    %c0_28 = arith.constant 0 : index
    %40 = vector.load %arg10[%c0_27, %c0_28] : memref<72x288xf32, #tpu.memory_space<vmem>>, vector<8x288xf32>
    tpu.vector_store %arg10[%c0_27, %c0_28], %39 {strides = array<i32>} : memref<72x288xf32, #tpu.memory_space<vmem>>, vector<8x288xf32>,
    %c0_29 = arith.constant 0 : index
    %c1 = arith.constant 1 : index
    %41 = vector.load %arg8[%c0_29, %c1] : memref<8x342xf32, #tpu.memory_space<vmem>>, vector<8x288xf32>
    %c8 = arith.constant 8 : index
    %c0_30 = arith.constant 0 : index
    %42 = vector.load %arg10[%c8, %c0_30] : memref<72x288xf32, #tpu.memory_space<vmem>>, vector<8x288xf32>
    tpu.vector_store %arg10[%c8, %c0_30], %41 {strides = array<i32>} : memref<72x288xf32, #tpu.memory_space<vmem>>, vector<8x288xf32>,
    %c0_31 = arith.constant 0 : index
    %c2 = arith.constant 2 : index
    %43 = vector.load %arg8[%c0_31, %c2] : memref<8x342xf32, #tpu.memory_space<vmem>>, vector<8x288xf32>
    %c16 = arith.constant 16 : index
    %c0_32 = arith.constant 0 : index
    %44 = vector.load %arg10[%c16, %c0_32] : memref<72x288xf32, #tpu.memory_space<vmem>>, vector<8x288xf32>
    tpu.vector_store %arg10[%c16, %c0_32], %43 {strides = array<i32>} : memref<72x288xf32, #tpu.memory_space<vmem>>, vector<8x288xf32>,
    %c0_33 = arith.constant 0 : index
    %c18 = arith.constant 18 : index
    %45 = vector.load %arg8[%c0_33, %c18] : memref<8x342xf32, #tpu.memory_space<vmem>>, vector<8x288xf32>
    %c24 = arith.constant 24 : index
    %c0_34 = arith.constant 0 : index
    %46 = vector.load %arg10[%c24, %c0_34] : memref<72x288xf32, #tpu.memory_space<vmem>>, vector<8x288xf32>
    tpu.vector_store %arg10[%c24, %c0_34], %45 {strides = array<i32>} : memref<72x288xf32, #tpu.memory_space<vmem>>, vector<8x288xf32>,
    %c0_35 = arith.constant 0 : index
    %c19_36 = arith.constant 19 : index
    %47 = vector.load %arg8[%c0_35, %c19_36] : memref<8x342xf32, #tpu.memory_space<vmem>>, vector<8x288xf32>
    %c32 = arith.constant 32 : index
    %c0_37 = arith.constant 0 : index
    %48 = vector.load %arg10[%c32, %c0_37] : memref<72x288xf32, #tpu.memory_space<vmem>>, vector<8x288xf32>
    tpu.vector_store %arg10[%c32, %c0_37], %47 {strides = array<i32>} : memref<72x288xf32, #tpu.memory_space<vmem>>, vector<8x288xf32>,
    %c0_38 = arith.constant 0 : index
    %c20 = arith.constant 20 : index
    %49 = vector.load %arg8[%c0_38, %c20] : memref<8x342xf32, #tpu.memory_space<vmem>>, vector<8x288xf32>
    %c40 = arith.constant 40 : index
    %c0_39 = arith.constant 0 : index
    %50 = vector.load %arg10[%c40, %c0_39] : memref<72x288xf32, #tpu.memory_space<vmem>>, vector<8x288xf32>
    tpu.vector_store %arg10[%c40, %c0_39], %49 {strides = array<i32>} : memref<72x288xf32, #tpu.memory_space<vmem>>, vector<8x288xf32>,
    %c0_40 = arith.constant 0 : index
    %c36 = arith.constant 36 : index
    %51 = vector.load %arg8[%c0_40, %c36] : memref<8x342xf32, #tpu.memory_space<vmem>>, vector<8x288xf32>
    %c48 = arith.constant 48 : index
    %c0_41 = arith.constant 0 : index
    %52 = vector.load %arg10[%c48, %c0_41] : memref<72x288xf32, #tpu.memory_space<vmem>>, vector<8x288xf32>
    tpu.vector_store %arg10[%c48, %c0_41], %51 {strides = array<i32>} : memref<72x288xf32, #tpu.memory_space<vmem>>, vector<8x288xf32>,
    %c0_42 = arith.constant 0 : index
    %c37_43 = arith.constant 37 : index
    %53 = vector.load %arg8[%c0_42, %c37_43] : memref<8x342xf32, #tpu.memory_space<vmem>>, vector<8x288xf32>
    %c56 = arith.constant 56 : index
    %c0_44 = arith.constant 0 : index
    %54 = vector.load %arg10[%c56, %c0_44] : memref<72x288xf32, #tpu.memory_space<vmem>>, vector<8x288xf32>
    tpu.vector_store %arg10[%c56, %c0_44], %53 {strides = array<i32>} : memref<72x288xf32, #tpu.memory_space<vmem>>, vector<8x288xf32>,
    %c0_45 = arith.constant 0 : index
    %c38 = arith.constant 38 : index
    %55 = vector.load %arg8[%c0_45, %c38] : memref<8x342xf32, #tpu.memory_space<vmem>>, vector<8x288xf32>
    %c64 = arith.constant 64 : index
    %c0_46 = arith.constant 0 : index
    %56 = vector.load %arg10[%c64, %c0_46] : memref<72x288xf32, #tpu.memory_space<vmem>>, vector<8x288xf32>
    tpu.vector_store %arg10[%c64, %c0_46], %55 {strides = array<i32>} : memref<72x288xf32, #tpu.memory_space<vmem>>, vector<8x288xf32>,
    %c0_47 = arith.constant 0 : index
    %c0_48 = arith.constant 0 : index
    %57 = vector.load %arg2[%c0_47, %c0_48] : memref<8x72xf32, #tpu.memory_space<vmem>>, vector<8x72xf32>
    %c0_49 = arith.constant 0 : index
    %c0_50 = arith.constant 0 : index
    %58 = vector.load %arg10[%c0_49, %c0_50] : memref<72x288xf32, #tpu.memory_space<vmem>>, vector<72x288xf32>
    %cst_51 = arith.constant dense<0.000000e+00> : vector<8x288xf32>
    %59 = tpu.matmul %57, %58, %cst_51 {dimension_numbers = #tpu.dot_dimension_numbers<[1], [0], [0], [1], [0, 0, 1, 1], [], []>} : vector<8x72xf32>, vector<72x288xf32>, vector<8x288xf32> -> vector<8x288xf32>
    %c0_52 = arith.constant 0 : index
    %c0_53 = arith.constant 0 : index
    %60 = vector.load %arg3[%c0_52, %c0_53] : memref<8x1xf32, #tpu.memory_space<vmem>>, vector<8x1xf32>
    %61 = vector.broadcast %60 : vector<8x1xf32> to vector<8x288xf32>
    %62 = arith.addf %59, %61 : vector<8x288xf32>
    %cst_54 = arith.constant 0.000000e+00 : f32
    %63 = vector.broadcast %cst_54 : f32 to vector<8x288xf32>
    %64 = arith.maximumf %62, %63 : vector<8x288xf32>
    %65 = vector.broadcast %38 : vector<1x288xf32> to vector<8x288xf32>
    %66 = arith.mulf %64, %65 : vector<8x288xf32>
    %c0_55 = arith.constant 0 : index
    %c19_56 = arith.constant 19 : index
    %67 = vector.load %arg9[%c0_55, %c19_56] : memref<8x342xf32, #tpu.memory_space<vmem>>, vector<8x288xf32>
    tpu.vector_store %arg9[%c0_55, %c19_56], %66 {strides = array<i32>} : memref<8x342xf32, #tpu.memory_space<vmem>>, vector<8x288xf32>,
    %c0_57 = arith.constant 0 : index
    %c0_58 = arith.constant 0 : index
    %68 = vector.load %arg9[%c0_57, %c0_58] : memref<8x342xf32, #tpu.memory_space<vmem>>, vector<8x288xf32>
    %c0_59 = arith.constant 0 : index
    %c0_60 = arith.constant 0 : index
    %69 = vector.load %arg10[%c0_59, %c0_60] : memref<72x288xf32, #tpu.memory_space<vmem>>, vector<8x288xf32>
    tpu.vector_store %arg10[%c0_59, %c0_60], %68 {strides = array<i32>} : memref<72x288xf32, #tpu.memory_space<vmem>>, vector<8x288xf32>,
    %c0_61 = arith.constant 0 : index
    %c1_62 = arith.constant 1 : index
    %70 = vector.load %arg9[%c0_61, %c1_62] : memref<8x342xf32, #tpu.memory_space<vmem>>, vector<8x288xf32>
    %c8_63 = arith.constant 8 : index
    %c0_64 = arith.constant 0 : index
    %71 = vector.load %arg10[%c8_63, %c0_64] : memref<72x288xf32, #tpu.memory_space<vmem>>, vector<8x288xf32>
    tpu.vector_store %arg10[%c8_63, %c0_64], %70 {strides = array<i32>} : memref<72x288xf32, #tpu.memory_space<vmem>>, vector<8x288xf32>,
    %c0_65 = arith.constant 0 : index
    %c2_66 = arith.constant 2 : index
    %72 = vector.load %arg9[%c0_65, %c2_66] : memref<8x342xf32, #tpu.memory_space<vmem>>, vector<8x288xf32>
    %c16_67 = arith.constant 16 : index
    %c0_68 = arith.constant 0 : index
    %73 = vector.load %arg10[%c16_67, %c0_68] : memref<72x288xf32, #tpu.memory_space<vmem>>, vector<8x288xf32>
    tpu.vector_store %arg10[%c16_67, %c0_68], %72 {strides = array<i32>} : memref<72x288xf32, #tpu.memory_space<vmem>>, vector<8x288xf32>,
    %c0_69 = arith.constant 0 : index
    %c18_70 = arith.constant 18 : index
    %74 = vector.load %arg9[%c0_69, %c18_70] : memref<8x342xf32, #tpu.memory_space<vmem>>, vector<8x288xf32>
    %c24_71 = arith.constant 24 : index
    %c0_72 = arith.constant 0 : index
    %75 = vector.load %arg10[%c24_71, %c0_72] : memref<72x288xf32, #tpu.memory_space<vmem>>, vector<8x288xf32>
    tpu.vector_store %arg10[%c24_71, %c0_72], %74 {strides = array<i32>} : memref<72x288xf32, #tpu.memory_space<vmem>>, vector<8x288xf32>,
    %c0_73 = arith.constant 0 : index
    %c19_74 = arith.constant 19 : index
    %76 = vector.load %arg9[%c0_73, %c19_74] : memref<8x342xf32, #tpu.memory_space<vmem>>, vector<8x288xf32>
    %c32_75 = arith.constant 32 : index
    %c0_76 = arith.constant 0 : index
    %77 = vector.load %arg10[%c32_75, %c0_76] : memref<72x288xf32, #tpu.memory_space<vmem>>, vector<8x288xf32>
    tpu.vector_store %arg10[%c32_75, %c0_76], %76 {strides = array<i32>} : memref<72x288xf32, #tpu.memory_space<vmem>>, vector<8x288xf32>,
    %c0_77 = arith.constant 0 : index
    %c20_78 = arith.constant 20 : index
    %78 = vector.load %arg9[%c0_77, %c20_78] : memref<8x342xf32, #tpu.memory_space<vmem>>, vector<8x288xf32>
    %c40_79 = arith.constant 40 : index
    %c0_80 = arith.constant 0 : index
    %79 = vector.load %arg10[%c40_79, %c0_80] : memref<72x288xf32, #tpu.memory_space<vmem>>, vector<8x288xf32>
    tpu.vector_store %arg10[%c40_79, %c0_80], %78 {strides = array<i32>} : memref<72x288xf32, #tpu.memory_space<vmem>>, vector<8x288xf32>,
    %c0_81 = arith.constant 0 : index
    %c36_82 = arith.constant 36 : index
    %80 = vector.load %arg9[%c0_81, %c36_82] : memref<8x342xf32, #tpu.memory_space<vmem>>, vector<8x288xf32>
    %c48_83 = arith.constant 48 : index
    %c0_84 = arith.constant 0 : index
    %81 = vector.load %arg10[%c48_83, %c0_84] : memref<72x288xf32, #tpu.memory_space<vmem>>, vector<8x288xf32>
    tpu.vector_store %arg10[%c48_83, %c0_84], %80 {strides = array<i32>} : memref<72x288xf32, #tpu.memory_space<vmem>>, vector<8x288xf32>,
    %c0_85 = arith.constant 0 : index
    %c37_86 = arith.constant 37 : index
    %82 = vector.load %arg9[%c0_85, %c37_86] : memref<8x342xf32, #tpu.memory_space<vmem>>, vector<8x288xf32>
    %c56_87 = arith.constant 56 : index
    %c0_88 = arith.constant 0 : index
    %83 = vector.load %arg10[%c56_87, %c0_88] : memref<72x288xf32, #tpu.memory_space<vmem>>, vector<8x288xf32>
    tpu.vector_store %arg10[%c56_87, %c0_88], %82 {strides = array<i32>} : memref<72x288xf32, #tpu.memory_space<vmem>>, vector<8x288xf32>,
    %c0_89 = arith.constant 0 : index
    %c38_90 = arith.constant 38 : index
    %84 = vector.load %arg9[%c0_89, %c38_90] : memref<8x342xf32, #tpu.memory_space<vmem>>, vector<8x288xf32>
    %c64_91 = arith.constant 64 : index
    %c0_92 = arith.constant 0 : index
    %85 = vector.load %arg10[%c64_91, %c0_92] : memref<72x288xf32, #tpu.memory_space<vmem>>, vector<8x288xf32>
    tpu.vector_store %arg10[%c64_91, %c0_92], %84 {strides = array<i32>} : memref<72x288xf32, #tpu.memory_space<vmem>>, vector<8x288xf32>,
    %c0_93 = arith.constant 0 : index
    %c0_94 = arith.constant 0 : index
    %86 = vector.load %arg4[%c0_93, %c0_94] : memref<8x72xf32, #tpu.memory_space<vmem>>, vector<8x72xf32>
    %c0_95 = arith.constant 0 : index
    %c0_96 = arith.constant 0 : index
    %87 = vector.load %arg10[%c0_95, %c0_96] : memref<72x288xf32, #tpu.memory_space<vmem>>, vector<72x288xf32>
    %cst_97 = arith.constant dense<0.000000e+00> : vector<8x288xf32>
    %88 = tpu.matmul %86, %87, %cst_97 {dimension_numbers = #tpu.dot_dimension_numbers<[1], [0], [0], [1], [0, 0, 1, 1], [], []>} : vector<8x72xf32>, vector<72x288xf32>, vector<8x288xf32> -> vector<8x288xf32>
    %c0_98 = arith.constant 0 : index
    %c0_99 = arith.constant 0 : index
    %89 = vector.load %arg5[%c0_98, %c0_99] : memref<8x1xf32, #tpu.memory_space<vmem>>, vector<8x1xf32>
    %90 = vector.broadcast %89 : vector<8x1xf32> to vector<8x288xf32>
    %91 = arith.addf %88, %90 : vector<8x288xf32>
    %cst_100 = arith.constant 0.000000e+00 : f32
    %92 = vector.broadcast %cst_100 : f32 to vector<8x288xf32>
    %93 = arith.maximumf %91, %92 : vector<8x288xf32>
    %94 = vector.extract_strided_slice %93 {offsets = [0, 0], sizes = [8, 16], strides = [1, 1]} : vector<8x288xf32> to vector<8x16xf32>
    %c0_101 = arith.constant 0 : index
    %c0_102 = arith.constant 0 : index
    %c0_103 = arith.constant 0 : index
    %95 = vector.load %arg7[%c0_101, %c0_102, %c0_103] : memref<1x8x256xf32, #tpu.memory_space<vmem>>, vector<1x8x16xf32>
    %96 = vector.shape_cast %95 : vector<1x8x16xf32> to vector<8x16xf32>
    %97 = vector.shape_cast %94 : vector<8x16xf32> to vector<1x8x16xf32>
    tpu.vector_store %arg7[%c0_101, %c0_102, %c0_103], %97 {strides = array<i32>} : memref<1x8x256xf32, #tpu.memory_space<vmem>>, vector<1x8x16xf32>,
    %98 = vector.extract_strided_slice %93 {offsets = [0, 18], sizes = [8, 16], strides = [1, 1]} : vector<8x288xf32> to vector<8x16xf32>
    %c0_104 = arith.constant 0 : index
    %c0_105 = arith.constant 0 : index
    %c16_106 = arith.constant 16 : index
    %99 = vector.load %arg7[%c0_104, %c0_105, %c16_106] : memref<1x8x256xf32, #tpu.memory_space<vmem>>, vector<1x8x16xf32>
    %100 = vector.shape_cast %99 : vector<1x8x16xf32> to vector<8x16xf32>
    %101 = vector.shape_cast %98 : vector<8x16xf32> to vector<1x8x16xf32>
    tpu.vector_store %arg7[%c0_104, %c0_105, %c16_106], %101 {strides = array<i32>} : memref<1x8x256xf32, #tpu.memory_space<vmem>>, vector<1x8x16xf32>,
    %102 = vector.extract_strided_slice %93 {offsets = [0, 36], sizes = [8, 16], strides = [1, 1]} : vector<8x288xf32> to vector<8x16xf32>
    %c0_107 = arith.constant 0 : index
    %c0_108 = arith.constant 0 : index
    %c32_109 = arith.constant 32 : index
    %103 = vector.load %arg7[%c0_107, %c0_108, %c32_109] : memref<1x8x256xf32, #tpu.memory_space<vmem>>, vector<1x8x16xf32>
    %104 = vector.shape_cast %103 : vector<1x8x16xf32> to vector<8x16xf32>
    %105 = vector.shape_cast %102 : vector<8x16xf32> to vector<1x8x16xf32>
    tpu.vector_store %arg7[%c0_107, %c0_108, %c32_109], %105 {strides = array<i32>} : memref<1x8x256xf32, #tpu.memory_space<vmem>>, vector<1x8x16xf32>,
    %106 = vector.extract_strided_slice %93 {offsets = [0, 54], sizes = [8, 16], strides = [1, 1]} : vector<8x288xf32> to vector<8x16xf32>
    %c0_110 = arith.constant 0 : index
    %c0_111 = arith.constant 0 : index
    %c48_112 = arith.constant 48 : index
    %107 = vector.load %arg7[%c0_110, %c0_111, %c48_112] : memref<1x8x256xf32, #tpu.memory_space<vmem>>, vector<1x8x16xf32>
    %108 = vector.shape_cast %107 : vector<1x8x16xf32> to vector<8x16xf32>
    %109 = vector.shape_cast %106 : vector<8x16xf32> to vector<1x8x16xf32>
    tpu.vector_store %arg7[%c0_110, %c0_111, %c48_112], %109 {strides = array<i32>} : memref<1x8x256xf32, #tpu.memory_space<vmem>>, vector<1x8x16xf32>,
    %110 = vector.extract_strided_slice %93 {offsets = [0, 72], sizes = [8, 16], strides = [1, 1]} : vector<8x288xf32> to vector<8x16xf32>
    %c0_113 = arith.constant 0 : index
    %c0_114 = arith.constant 0 : index
    %c64_115 = arith.constant 64 : index
    %111 = vector.load %arg7[%c0_113, %c0_114, %c64_115] : memref<1x8x256xf32, #tpu.memory_space<vmem>>, vector<1x8x16xf32>
    %112 = vector.shape_cast %111 : vector<1x8x16xf32> to vector<8x16xf32>
    %113 = vector.shape_cast %110 : vector<8x16xf32> to vector<1x8x16xf32>
    tpu.vector_store %arg7[%c0_113, %c0_114, %c64_115], %113 {strides = array<i32>} : memref<1x8x256xf32, #tpu.memory_space<vmem>>, vector<1x8x16xf32>,
    %114 = vector.extract_strided_slice %93 {offsets = [0, 90], sizes = [8, 16], strides = [1, 1]} : vector<8x288xf32> to vector<8x16xf32>
    %c0_116 = arith.constant 0 : index
    %c0_117 = arith.constant 0 : index
    %c80 = arith.constant 80 : index
    %115 = vector.load %arg7[%c0_116, %c0_117, %c80] : memref<1x8x256xf32, #tpu.memory_space<vmem>>, vector<1x8x16xf32>
    %116 = vector.shape_cast %115 : vector<1x8x16xf32> to vector<8x16xf32>
    %117 = vector.shape_cast %114 : vector<8x16xf32> to vector<1x8x16xf32>
    tpu.vector_store %arg7[%c0_116, %c0_117, %c80], %117 {strides = array<i32>} : memref<1x8x256xf32, #tpu.memory_space<vmem>>, vector<1x8x16xf32>,
    %118 = vector.extract_strided_slice %93 {offsets = [0, 108], sizes = [8, 16], strides = [1, 1]} : vector<8x288xf32> to vector<8x16xf32>
    %c0_118 = arith.constant 0 : index
    %c0_119 = arith.constant 0 : index
    %c96 = arith.constant 96 : index
    %119 = vector.load %arg7[%c0_118, %c0_119, %c96] : memref<1x8x256xf32, #tpu.memory_space<vmem>>, vector<1x8x16xf32>
    %120 = vector.shape_cast %119 : vector<1x8x16xf32> to vector<8x16xf32>
    %121 = vector.shape_cast %118 : vector<8x16xf32> to vector<1x8x16xf32>
    tpu.vector_store %arg7[%c0_118, %c0_119, %c96], %121 {strides = array<i32>} : memref<1x8x256xf32, #tpu.memory_space<vmem>>, vector<1x8x16xf32>,
    %122 = vector.extract_strided_slice %93 {offsets = [0, 126], sizes = [8, 16], strides = [1, 1]} : vector<8x288xf32> to vector<8x16xf32>
    %c0_120 = arith.constant 0 : index
    %c0_121 = arith.constant 0 : index
    %c112 = arith.constant 112 : index
    %123 = vector.load %arg7[%c0_120, %c0_121, %c112] : memref<1x8x256xf32, #tpu.memory_space<vmem>>, vector<1x8x16xf32>
    %124 = vector.shape_cast %123 : vector<1x8x16xf32> to vector<8x16xf32>
    %125 = vector.shape_cast %122 : vector<8x16xf32> to vector<1x8x16xf32>
    tpu.vector_store %arg7[%c0_120, %c0_121, %c112], %125 {strides = array<i32>} : memref<1x8x256xf32, #tpu.memory_space<vmem>>, vector<1x8x16xf32>,
    %126 = vector.extract_strided_slice %93 {offsets = [0, 144], sizes = [8, 16], strides = [1, 1]} : vector<8x288xf32> to vector<8x16xf32>
    %c0_122 = arith.constant 0 : index
    %c0_123 = arith.constant 0 : index
    %c128 = arith.constant 128 : index
    %127 = vector.load %arg7[%c0_122, %c0_123, %c128] : memref<1x8x256xf32, #tpu.memory_space<vmem>>, vector<1x8x16xf32>
    %128 = vector.shape_cast %127 : vector<1x8x16xf32> to vector<8x16xf32>
    %129 = vector.shape_cast %126 : vector<8x16xf32> to vector<1x8x16xf32>
    tpu.vector_store %arg7[%c0_122, %c0_123, %c128], %129 {strides = array<i32>} : memref<1x8x256xf32, #tpu.memory_space<vmem>>, vector<1x8x16xf32>,
    %130 = vector.extract_strided_slice %93 {offsets = [0, 162], sizes = [8, 16], strides = [1, 1]} : vector<8x288xf32> to vector<8x16xf32>
    %c0_124 = arith.constant 0 : index
    %c0_125 = arith.constant 0 : index
    %c144 = arith.constant 144 : index
    %131 = vector.load %arg7[%c0_124, %c0_125, %c144] : memref<1x8x256xf32, #tpu.memory_space<vmem>>, vector<1x8x16xf32>
    %132 = vector.shape_cast %131 : vector<1x8x16xf32> to vector<8x16xf32>
    %133 = vector.shape_cast %130 : vector<8x16xf32> to vector<1x8x16xf32>
    tpu.vector_store %arg7[%c0_124, %c0_125, %c144], %133 {strides = array<i32>} : memref<1x8x256xf32, #tpu.memory_space<vmem>>, vector<1x8x16xf32>,
    %134 = vector.extract_strided_slice %93 {offsets = [0, 180], sizes = [8, 16], strides = [1, 1]} : vector<8x288xf32> to vector<8x16xf32>
    %c0_126 = arith.constant 0 : index
    %c0_127 = arith.constant 0 : index
    %c160 = arith.constant 160 : index
    %135 = vector.load %arg7[%c0_126, %c0_127, %c160] : memref<1x8x256xf32, #tpu.memory_space<vmem>>, vector<1x8x16xf32>
    %136 = vector.shape_cast %135 : vector<1x8x16xf32> to vector<8x16xf32>
    %137 = vector.shape_cast %134 : vector<8x16xf32> to vector<1x8x16xf32>
    tpu.vector_store %arg7[%c0_126, %c0_127, %c160], %137 {strides = array<i32>} : memref<1x8x256xf32, #tpu.memory_space<vmem>>, vector<1x8x16xf32>,
    %138 = vector.extract_strided_slice %93 {offsets = [0, 198], sizes = [8, 16], strides = [1, 1]} : vector<8x288xf32> to vector<8x16xf32>
    %c0_128 = arith.constant 0 : index
    %c0_129 = arith.constant 0 : index
    %c176 = arith.constant 176 : index
    %139 = vector.load %arg7[%c0_128, %c0_129, %c176] : memref<1x8x256xf32, #tpu.memory_space<vmem>>, vector<1x8x16xf32>
    %140 = vector.shape_cast %139 : vector<1x8x16xf32> to vector<8x16xf32>
    %141 = vector.shape_cast %138 : vector<8x16xf32> to vector<1x8x16xf32>
    tpu.vector_store %arg7[%c0_128, %c0_129, %c176], %141 {strides = array<i32>} : memref<1x8x256xf32, #tpu.memory_space<vmem>>, vector<1x8x16xf32>,
    %142 = vector.extract_strided_slice %93 {offsets = [0, 216], sizes = [8, 16], strides = [1, 1]} : vector<8x288xf32> to vector<8x16xf32>
    %c0_130 = arith.constant 0 : index
    %c0_131 = arith.constant 0 : index
    %c192 = arith.constant 192 : index
    %143 = vector.load %arg7[%c0_130, %c0_131, %c192] : memref<1x8x256xf32, #tpu.memory_space<vmem>>, vector<1x8x16xf32>
    %144 = vector.shape_cast %143 : vector<1x8x16xf32> to vector<8x16xf32>
    %145 = vector.shape_cast %142 : vector<8x16xf32> to vector<1x8x16xf32>
    tpu.vector_store %arg7[%c0_130, %c0_131, %c192], %145 {strides = array<i32>} : memref<1x8x256xf32, #tpu.memory_space<vmem>>, vector<1x8x16xf32>,
    %146 = vector.extract_strided_slice %93 {offsets = [0, 234], sizes = [8, 16], strides = [1, 1]} : vector<8x288xf32> to vector<8x16xf32>
    %c0_132 = arith.constant 0 : index
    %c0_133 = arith.constant 0 : index
    %c208 = arith.constant 208 : index
    %147 = vector.load %arg7[%c0_132, %c0_133, %c208] : memref<1x8x256xf32, #tpu.memory_space<vmem>>, vector<1x8x16xf32>
    %148 = vector.shape_cast %147 : vector<1x8x16xf32> to vector<8x16xf32>
    %149 = vector.shape_cast %146 : vector<8x16xf32> to vector<1x8x16xf32>
    tpu.vector_store %arg7[%c0_132, %c0_133, %c208], %149 {strides = array<i32>} : memref<1x8x256xf32, #tpu.memory_space<vmem>>, vector<1x8x16xf32>,
    %150 = vector.extract_strided_slice %93 {offsets = [0, 252], sizes = [8, 16], strides = [1, 1]} : vector<8x288xf32> to vector<8x16xf32>
    %c0_134 = arith.constant 0 : index
    %c0_135 = arith.constant 0 : index
    %c224 = arith.constant 224 : index
    %151 = vector.load %arg7[%c0_134, %c0_135, %c224] : memref<1x8x256xf32, #tpu.memory_space<vmem>>, vector<1x8x16xf32>
    %152 = vector.shape_cast %151 : vector<1x8x16xf32> to vector<8x16xf32>
    %153 = vector.shape_cast %150 : vector<8x16xf32> to vector<1x8x16xf32>
    tpu.vector_store %arg7[%c0_134, %c0_135, %c224], %153 {strides = array<i32>} : memref<1x8x256xf32, #tpu.memory_space<vmem>>, vector<1x8x16xf32>,
    %154 = vector.extract_strided_slice %93 {offsets = [0, 270], sizes = [8, 16], strides = [1, 1]} : vector<8x288xf32> to vector<8x16xf32>
    %c0_136 = arith.constant 0 : index
    %c0_137 = arith.constant 0 : index
    %c240 = arith.constant 240 : index
    %155 = vector.load %arg7[%c0_136, %c0_137, %c240] : memref<1x8x256xf32, #tpu.memory_space<vmem>>, vector<1x8x16xf32>
    %156 = vector.shape_cast %155 : vector<1x8x16xf32> to vector<8x16xf32>
    %157 = vector.shape_cast %154 : vector<8x16xf32> to vector<1x8x16xf32>
    tpu.vector_store %arg7[%c0_136, %c0_137, %c240], %157 {strides = array<i32>} : memref<1x8x256xf32, #tpu.memory_space<vmem>>, vector<1x8x16xf32>,
    return
  }
  func.func @transform_0(%arg0: i32) -> (i32, i32, i32) {
    %c0_i32 = arith.constant 0 : i32
    %c0_i32_0 = arith.constant 0 : i32
    %c0_i32_1 = arith.constant 0 : i32
    return %arg0, %c0_i32, %c0_i32_0 : i32, i32, i32
  }
  func.func @transform_1(%arg0: i32) -> (i32, i32) {
    %c0_i32 = arith.constant 0 : i32
    %c0_i32_0 = arith.constant 0 : i32
    %c0_i32_1 = arith.constant 0 : i32
    return %c0_i32, %c0_i32_0 : i32, i32
  }
  func.func @transform_2(%arg0: i32) -> (i32, i32) {
    %c0_i32 = arith.constant 0 : i32
    %c0_i32_0 = arith.constant 0 : i32
    %c0_i32_1 = arith.constant 0 : i32
    return %c0_i32, %c0_i32_0 : i32, i32
  }
  func.func @transform_3(%arg0: i32) -> (i32, i32) {
    %c0_i32 = arith.constant 0 : i32
    %c0_i32_0 = arith.constant 0 : i32
    %c0_i32_1 = arith.constant 0 : i32
    return %c0_i32, %c0_i32_0 : i32, i32
  }
  func.func @transform_4(%arg0: i32) -> (i32, i32) {
    %c0_i32 = arith.constant 0 : i32
    %c0_i32_0 = arith.constant 0 : i32
    %c0_i32_1 = arith.constant 0 : i32
    return %c0_i32, %c0_i32_0 : i32, i32
  }
  func.func @transform_5(%arg0: i32) -> (i32, i32) {
    %c0_i32 = arith.constant 0 : i32
    %c0_i32_0 = arith.constant 0 : i32
    %c0_i32_1 = arith.constant 0 : i32
    return %c0_i32, %c0_i32_0 : i32, i32
  }
  func.func @transform_6(%arg0: i32) -> (i32, i32, i32) {
    %c0_i32 = arith.constant 0 : i32
    %c0_i32_0 = arith.constant 0 : i32
    %c0_i32_1 = arith.constant 0 : i32
    return %arg0, %c0_i32, %c0_i32_0 : i32, i32, i32
  }
}

</mosaic_0001>

<llo_original>
// kernel: tpu_custom_call.1
$region0: #{tpu_custom_call.1}
  #allocation0 [shape = 'u32[]', space=smem, size = 0x4, offset = 0x4, fixed_abs, tag = 'smem constant byte address 0x4 - core index']
  #allocation1 [shape = 'u32[144,128]{1,0:T(1,128)}', space=vmem, size = 0x12000, scoped, tag = 'internal scratch']
  #allocation2 [shape = 'f32[8,342]{1,0:T(8,128)}', space=vmem, size = 0x3000, scoped, tag = 'scratch operand']
  #allocation3 [shape = 'f32[8,342]{1,0:T(8,128)}', space=vmem, size = 0x3000, scoped, tag = 'scratch operand']
  #allocation4 [shape = 'f32[72,288]{1,0:T(8,128)}', space=vmem, size = 0x1b000, scoped, tag = 'scratch operand']
  %s0 = inlined_call_operand.vmem [shape: f32[2,4,256], index: 0, kind: input, shape index: {}]
  %s1 = inlined_call_operand.hbm [shape: f32[8,72], index: 1, kind: input, shape index: {}]
  %s2 = inlined_call_operand.vmem [shape: f32[8,1], index: 2, kind: input, shape index: {}]
  %s3 = inlined_call_operand.vmem [shape: f32[8,72], index: 3, kind: input, shape index: {}]
  %s4 = inlined_call_operand.vmem [shape: f32[8,1], index: 4, kind: input, shape index: {}]
  %s5 = inlined_call_operand.vmem [shape: f32[1,288], index: 5, kind: input, shape index: {}]
  %s6 = inlined_call_operand.hbm [shape: f32[2,8,256], index: 6, kind: output, shape index: {}]
  %s7 = sld [smem:[#allocation0]]
  $region61: #{tpu_custom_call.1} parent=0
    _
  %s9 = ssub.s32 1, %s7
  %s10 = scalar_select 0, %s9, %s7
  $region1: #{tpu_custom_call.1} parent=0
    #allocation5 [shape = 'u8[4096]{0}', space=vmem, size = 0x1000, scoped, tag = 'input window, operand 1, single buffered']
    #allocation6 [shape = 's32[2]{0}', space=sflag, size = 0x8, scoped, tag = 'scoped memory for tpu_custom_call.1']
    #allocation7 [shape = 's32[2]{0}', space=sflag, size = 0x8, scoped, tag = 'scoped memory for tpu_custom_call.1']
    #allocation8 [shape = 'u8[16384]{0}', space=vmem, size = 0x4000, scoped, tag = 'output window, operand 0']
    %11 = vsyncpa [#allocation6], 0
    %12 = vsyncpa [#allocation7], 0
    %s13 = scalar_lea.sflag [#allocation7], 1
    %14 = vsyncpa %s13, 0
    loop: start=0, step=1, limit=4
    $region2: #{tpu_custom_call.1} parent=1 // loop_pre_header
      _
    $region3: #{tpu_custom_call.1} parent=1 // loop_header
      %s16 = sphi 0, %s20
      %p17 = scmp.ge.s32.totalorder %s16, 4
      %s26 = sphi 0, %s28
      %s29 = sphi 0, %s26
      %s30 = sphi 0, %s29
      %s46 = sphi 0, %s30
      %s50 = sphi 0, %s50
      %s52 = sphi 0, %s50
      %s53 = sphi 0, %s52
      %s67 = sphi 0, %s53
      %s71 = sphi 0, %s71
      %s73 = sphi 0, %s71
      %s74 = sphi 0, %s73
      %s88 = sphi 0, %s74
      %s92 = sphi 0, %s92
      %s94 = sphi 0, %s92
      %s95 = sphi 0, %s94
      %s109 = sphi 0, %s95
      %s113 = sphi 0, %s113
      %s115 = sphi 0, %s113
      %s116 = sphi 0, %s115
      %s130 = sphi 0, %s116
      %s134 = sphi 0, %s134
      %s136 = sphi 0, %s134
      %s137 = sphi 0, %s136
      %s151 = sphi 0, %s137
      %s157 = sphi 0, %s159
      %s160 = sphi 0, %s157
      %s161 = sphi 0, %s160
      %s177 = sphi 0, %s161
    $region4: #{tpu_custom_call.1} parent=1 // loop_header_branch
      %19 = sbr.rel (%p17) target = $region8
    $region5: #{tpu_custom_call.1} parent=1 // loop_body
      %s21 = ssub.s32 %s16, 1
      %s22 = ssub.s32 %s16, 2
      %s23 = sadd.s32 %s16, 1
      %s24 = ssub.s32 %s16, %s23
      %p25 = scmp.eq.s32.totalorder %s24, 0
      %s27 = sadd.s32 %s26, 1
      %s28 = scalar_select %p25, %s26, %s27
      %p31 = pneg %p25
      %p32 = scmp.eq.s32.totalorder %s16, 1
      %p33 = por %p31, %p32
      %p34 = scmp.ne.s32.totalorder %s26, %s29
      %p35 = scmp.eq.s32.totalorder %s16, 0
      %p36 = por %p34, %p35
      %p37 = scmp.ne.s32.totalorder %s26, %s29
      %p38 = scmp.eq.s32.totalorder %s21, 1
      %p39 = por %p37, %p38
      %p40 = scmp.ne.s32.totalorder %s29, %s30
      %p41 = scmp.eq.s32.totalorder %s21, 0
      %p42 = por %p40, %p41
      %p43 = scmp.ne.s32.totalorder %s29, %s30
      %p44 = scmp.eq.s32.totalorder %s22, 1
      %p45 = por %p43, %p44
      %p47 = scmp.ne.s32.totalorder %s30, %s46
      %p48 = scmp.eq.s32.totalorder %s22, 0
      %p49 = por %p47, %p48
      %s51 = sadd.s32 %s50, 1
      %p54 = scmp.eq.s32.totalorder %s16, 1
      %p55 = scmp.ne.s32.totalorder %s50, %s52
      %p56 = scmp.eq.s32.totalorder %s16, 0
      %p57 = por %p55, %p56
      %p58 = scmp.ne.s32.totalorder %s50, %s52
      %p59 = scmp.eq.s32.totalorder %s21, 1
      %p60 = por %p58, %p59
      %p61 = scmp.ne.s32.totalorder %s52, %s53
      %p62 = scmp.eq.s32.totalorder %s21, 0
      %p63 = por %p61, %p62
      %p64 = scmp.ne.s32.totalorder %s52, %s53
      %p65 = scmp.eq.s32.totalorder %s22, 1
      %p66 = por %p64, %p65
      %p68 = scmp.ne.s32.totalorder %s53, %s67
      %p69 = scmp.eq.s32.totalorder %s22, 0
      %p70 = por %p68, %p69
      %s72 = sadd.s32 %s71, 1
      %p75 = scmp.eq.s32.totalorder %s16, 1
      %p76 = scmp.ne.s32.totalorder %s71, %s73
      %p77 = scmp.eq.s32.totalorder %s16, 0
      %p78 = por %p76, %p77
      %p79 = scmp.ne.s32.totalorder %s71, %s73
      %p80 = scmp.eq.s32.totalorder %s21, 1
      %p81 = por %p79, %p80
      %p82 = scmp.ne.s32.totalorder %s73, %s74
      %p83 = scmp.eq.s32.totalorder %s21, 0
      %p84 = por %p82, %p83
      %p85 = scmp.ne.s32.totalorder %s73, %s74
      %p86 = scmp.eq.s32.totalorder %s22, 1
      %p87 = por %p85, %p86
      %p89 = scmp.ne.s32.totalorder %s74, %s88
      %p90 = scmp.eq.s32.totalorder %s22, 0
      %p91 = por %p89, %p90
      %s93 = sadd.s32 %s92, 1
      %p96 = scmp.eq.s32.totalorder %s16, 1
      %p97 = scmp.ne.s32.totalorder %s92, %s94
      %p98 = scmp.eq.s32.totalorder %s16, 0
      %p99 = por %p97, %p98
      %p100 = scmp.ne.s32.totalorder %s92, %s94
      %p101 = scmp.eq.s32.totalorder %s21, 1
      %p102 = por %p100, %p101
      %p103 = scmp.ne.s32.totalorder %s94, %s95
      %p104 = scmp.eq.s32.totalorder %s21, 0
      %p105 = por %p103, %p104
      %p106 = scmp.ne.s32.totalorder %s94, %s95
      %p107 = scmp.eq.s32.totalorder %s22, 1
      %p108 = por %p106, %p107
      %p110 = scmp.ne.s32.totalorder %s95, %s109
      %p111 = scmp.eq.s32.totalorder %s22, 0
      %p112 = por %p110, %p111
      %s114 = sadd.s32 %s113, 1
      %p117 = scmp.eq.s32.totalorder %s16, 1
      %p118 = scmp.ne.s32.totalorder %s113, %s115
      %p119 = scmp.eq.s32.totalorder %s16, 0
      %p120 = por %p118, %p119
      %p121 = scmp.ne.s32.totalorder %s113, %s115
      %p122 = scmp.eq.s32.totalorder %s21, 1
      %p123 = por %p121, %p122
      %p124 = scmp.ne.s32.totalorder %s115, %s116
      %p125 = scmp.eq.s32.totalorder %s21, 0
      %p126 = por %p124, %p125
      %p127 = scmp.ne.s32.totalorder %s115, %s116
      %p128 = scmp.eq.s32.totalorder %s22, 1
      %p129 = por %p127, %p128
      %p131 = scmp.ne.s32.totalorder %s116, %s130
      %p132 = scmp.eq.s32.totalorder %s22, 0
      %p133 = por %p131, %p132
      %s135 = sadd.s32 %s134, 1
      %p138 = scmp.eq.s32.totalorder %s16, 1
      %p139 = scmp.ne.s32.totalorder %s134, %s136
      %p140 = scmp.eq.s32.totalorder %s16, 0
      %p141 = por %p139, %p140
      %p142 = scmp.ne.s32.totalorder %s134, %s136
      %p143 = scmp.eq.s32.totalorder %s21, 1
      %p144 = por %p142, %p143
      %p145 = scmp.ne.s32.totalorder %s136, %s137
      %p146 = scmp.eq.s32.totalorder %s21, 0
      %p147 = por %p145, %p146
      %p148 = scmp.ne.s32.totalorder %s136, %s137
      %p149 = scmp.eq.s32.totalorder %s22, 1
      %p150 = por %p148, %p149
      %p152 = scmp.ne.s32.totalorder %s137, %s151
      %p153 = scmp.eq.s32.totalorder %s22, 0
      %p154 = por %p152, %p153
      %s155 = ssub.s32 %s16, %s23
      %p156 = scmp.eq.s32.totalorder %s155, 0
      %s158 = sadd.s32 %s157, 1
      %s159 = scalar_select %p156, %s157, %s158
      %p162 = pneg %p156
      %p163 = scmp.eq.s32.totalorder %s16, 1
      %p164 = por %p162, %p163
      %p165 = scmp.ne.s32.totalorder %s157, %s160
      %p166 = scmp.eq.s32.totalorder %s16, 0
      %p167 = por %p165, %p166
      %p168 = scmp.ne.s32.totalorder %s157, %s160
      %p169 = scmp.eq.s32.totalorder %s21, 1
      %p170 = por %p168, %p169
      %p171 = scmp.ne.s32.totalorder %s160, %s161
      %p172 = scmp.eq.s32.totalorder %s21, 0
      %p173 = por %p171, %p172
      %p174 = scmp.ne.s32.totalorder %s160, %s161
      %p175 = scmp.eq.s32.totalorder %s22, 1
      %p176 = por %p174, %p175
      %p178 = scmp.ne.s32.totalorder %s161, %s177
      %p179 = scmp.eq.s32.totalorder %s22, 0
      %p180 = por %p178, %p179
      %p181 = scmp.le.s32.totalorder 1, %s16
      %p182 = scmp.lt.s32.totalorder %s16, 3
      %p183 = pnand %p181, %p182
      %p184 = pneg %p183
      // Predicated region
      $region9: #{tpu_custom_call.1} parent=5 // pred_check
        _
      $region10: #{tpu_custom_call.1} parent=5 // pred_check_branch
        %186 = sbr.rel (%p183) target = $region12
      $region11: #{tpu_custom_call.1} parent=5 // pred_region
        %s187 = ssub.s32 %s16, 1
        // Predicated region
        $region13: #{tpu_custom_call.1} parent=11 // pred_check
          %p188 = pneg %p63
        $region14: #{tpu_custom_call.1} parent=11 // pred_check_branch
          %190 = sbr.rel (%p188) target = $region16
        $region15: #{tpu_custom_call.1} parent=11 // pred_region
          %s192 = ssub.s32 128, 128
          %193 = vsyncadd [#allocation6], %s192
          %s195 = sshll.u32 [#allocation5], 4
          %s196 = int_to_ptr.vmem [resolvable:$true] %s195
          %198 = dma.hbm_to_vmem [thread:$0]  %s1, 128, %s196, [#allocation6]
        $region16: #{tpu_custom_call.1} parent=11 // pred_fallthru
          _
        // Predicated region
        $region17: #{tpu_custom_call.1} parent=11 // pred_check
          %p199 = pneg %p84
        $region18: #{tpu_custom_call.1} parent=11 // pred_check_branch
          %201 = sbr.rel (%p199) target = $region20
        $region19: #{tpu_custom_call.1} parent=11 // pred_region
          _
        $region20: #{tpu_custom_call.1} parent=11 // pred_fallthru
          _
        // Predicated region
        $region21: #{tpu_custom_call.1} parent=11 // pred_check
          %p202 = pneg %p105
        $region22: #{tpu_custom_call.1} parent=11 // pred_check_branch
          %204 = sbr.rel (%p202) target = $region24
        $region23: #{tpu_custom_call.1} parent=11 // pred_region
          _
        $region24: #{tpu_custom_call.1} parent=11 // pred_fallthru
          _
        // Predicated region
        $region25: #{tpu_custom_call.1} parent=11 // pred_check
          %p205 = pneg %p126
        $region26: #{tpu_custom_call.1} parent=11 // pred_check_branch
          %207 = sbr.rel (%p205) target = $region28
        $region27: #{tpu_custom_call.1} parent=11 // pred_region
          _
        $region28: #{tpu_custom_call.1} parent=11 // pred_fallthru
          _
        // Predicated region
        $region29: #{tpu_custom_call.1} parent=11 // pred_check
          %p208 = pneg %p147
        $region30: #{tpu_custom_call.1} parent=11 // pred_check_branch
          %210 = sbr.rel (%p208) target = $region32
        $region31: #{tpu_custom_call.1} parent=11 // pred_region
          _
        $region32: #{tpu_custom_call.1} parent=11 // pred_fallthru
          _
      $region12: #{tpu_custom_call.1} parent=5 // pred_fallthru
        _
      %p211 = scmp.lt.s32.totalorder %s16, 2
      // Predicated region
      $region33: #{tpu_custom_call.1} parent=5 // pred_check
        %p212 = pneg %p211
      $region34: #{tpu_custom_call.1} parent=5 // pred_check_branch
        %214 = sbr.rel (%p212) target = $region36
      $region35: #{tpu_custom_call.1} parent=5 // pred_region
        // Predicated region
        $region37: #{tpu_custom_call.1} parent=35 // pred_check
          %p215 = pneg %p36
        $region38: #{tpu_custom_call.1} parent=35 // pred_check_branch
          %217 = sbr.rel (%p215) target = $region40
        $region39: #{tpu_custom_call.1} parent=35 // pred_region
          %p218 = scmp.lt.s32.totalorder %s16, 1
          %s219 = scalar_select %p218, %s16, 1
          %s220 = smul.addr %s219, 2
          %s221 = smul.addr %s220, 4
          %s222 = scalar_lea.vmem %s0, %s221
        $region40: #{tpu_custom_call.1} parent=35 // pred_fallthru
          _
      $region36: #{tpu_custom_call.1} parent=5 // pred_fallthru
        _
      %p223 = scmp.le.s32.totalorder 1, %s16
      %p224 = scmp.lt.s32.totalorder %s16, 3
      %p225 = pnand %p223, %p224
      %p226 = pneg %p225
      // Predicated region
      $region41: #{tpu_custom_call.1} parent=5 // pred_check
        _
      $region42: #{tpu_custom_call.1} parent=5 // pred_check_branch
        %228 = sbr.rel (%p225) target = $region44
      $region43: #{tpu_custom_call.1} parent=5 // pred_region
        %s229 = ssub.s32 %s16, 1
        // Predicated region
        $region45: #{tpu_custom_call.1} parent=43 // pred_check
          %p230 = pneg %p63
        $region46: #{tpu_custom_call.1} parent=43 // pred_check_branch
          %232 = sbr.rel (%p230) target = $region48
        $region47: #{tpu_custom_call.1} parent=43 // pred_region
          %233 = dma.done [#allocation6], 128
        $region48: #{tpu_custom_call.1} parent=43 // pred_fallthru
          _
        %p234 = scmp.lt.s32.totalorder %s21, 1
        %s235 = scalar_select %p234, %s21, 1
        %s236 = smul.addr %s235, 2
        %s237 = smul.addr %s236, 4
        %s238 = scalar_lea.vmem %s0, %s237
        %p239 = pneg %p42
        %p240 = pneg %p39
        %p241 = pneg %p63
        %p242 = pneg %p60
        %p243 = pneg %p84
        %p244 = pneg %p81
        %p245 = pneg %p105
        %p246 = pneg %p102
        %p247 = pneg %p126
        %p248 = pneg %p123
        %p249 = pneg %p147
        %p250 = pneg %p144
        %p251 = pneg %p173
        %p252 = pneg %p170
        %s253 = sand.u32 %s160, 1
        %s254 = scalar_lea.sflag [#allocation7], %s253
        %s255 = sand.u32 %s160, 1
        %s256 = smul.addr %s255, 16
        %s257 = scalar_lea.vmem [#allocation8], %s256
        %p258 = scmp.lt.s32.totalorder %s21, 1
        %s259 = scalar_select %p258, %s21, 1
        %s260 = smul.addr %s259, 2
        %s261 = smul.addr %s260, 4
        %s262 = scalar_lea.vmem %s0, %s261
        %263 = vst [vmem:[#allocation2] sm:$0xff] 0.0
        %264 = vst [vmem:[#allocation2 + $0x8] sm:$0xff] 0.0
        %vm265 = vcmask 703488
        %266 = vst.msk [vmem:[#allocation2 + $0x10] sm:$0xff] %vm265, 0.0
        %267 = vst [vmem:[#allocation3] sm:$0xff] 0.0
        %268 = vst [vmem:[#allocation3 + $0x8] sm:$0xff] 0.0
        %269 = vst.msk [vmem:[#allocation3 + $0x10] sm:$0xff] %vm265, 0.0
        %v270 = vld [vmem:[%s262] sm:$0xff]
        %272 = vrot.lane.b32.xlu0 %v270, 19
        %v273 = vpop.permute.xlu0 %272
        %vm275 = vcmask 281752
        %276 = vst.msk [vmem:[#allocation2] sm:$0xf] %vm275, %v273
        %277 = vrot.lane.b32.xlu0 %v270, 21
        %v278 = vpop.permute.xlu0 %277
        %vm280 = vcmask 429352
        %281 = vst.msk [vmem:[#allocation2] sm:$0xf] %vm280, %v278
        %282 = vrot.lane.b32.xlu0 %v270, 23
        %v283 = vpop.permute.xlu0 %282
        %vm285 = vcmask 576952
        %286 = vst.msk [vmem:[#allocation2] sm:$0xf] %vm285, %v283
        %287 = vrot.lane.b32.xlu0 %v270, 25
        %v288 = vpop.permute.xlu0 %287
        %vm290 = vcmask 724552
        %291 = vst.msk [vmem:[#allocation2] sm:$0xf] %vm290, %v288
        %292 = vrot.lane.b32.xlu0 %v270, 27
        %v293 = vpop.permute.xlu0 %292
        %vm295 = vcmask 872152
        %296 = vst.msk [vmem:[#allocation2] sm:$0xf] %vm295, %v293
        %297 = vrot.lane.b32.xlu0 %v270, 29
        %v298 = vpop.permute.xlu0 %297
        %vm300 = vcmask 1019752
        %301 = vst.msk [vmem:[#allocation2] sm:$0xf] %vm300, %v298
        %302 = vrot.lane.b32.xlu0 %v270, 31
        %v303 = vpop.permute.xlu0 %302
        %vm305 = vcmask 1044472
        %306 = vst.msk [vmem:[#allocation2] sm:$0xf] %vm305, %v303
        %vm307 = vcmask 117760
        %308 = vst.msk [vmem:[#allocation2 + $0x8] sm:$0xf] %vm307, %v303
        %309 = vrot.lane.b32.xlu0 %v270, 33
        %v310 = vpop.permute.xlu0 %309
        %vm312 = vcmask 265352
        %313 = vst.msk [vmem:[#allocation2 + $0x8] sm:$0xf] %vm312, %v310
        %v314 = vcombine.high %v270, %v270
        %315 = vrot.lane.b32.xlu0 %v314, 35
        %v316 = vpop.permute.xlu0 %315
        %vm318 = vcmask 412952
        %319 = vst.msk [vmem:[#allocation2 + $0x8] sm:$0xf] %vm318, %v316
        %320 = vrot.lane.b32.xlu0 %v314, 37
        %v321 = vpop.permute.xlu0 %320
        %vm323 = vcmask 560552
        %324 = vst.msk [vmem:[#allocation2 + $0x8] sm:$0xf] %vm323, %v321
        %325 = vrot.lane.b32.xlu0 %v314, 39
        %v326 = vpop.permute.xlu0 %325
        %vm328 = vcmask 708152
        %329 = vst.msk [vmem:[#allocation2 + $0x8] sm:$0xf] %vm328, %v326
        %330 = vrot.lane.b32.xlu0 %v314, 41
        %v331 = vpop.permute.xlu0 %330
        %vm333 = vcmask 855752
        %334 = vst.msk [vmem:[#allocation2 + $0x8] sm:$0xf] %vm333, %v331
        %335 = vrot.lane.b32.xlu0 %v314, 43
        %v336 = vpop.permute.xlu0 %335
        %vm338 = vcmask 1003352
        %339 = vst.msk [vmem:[#allocation2 + $0x8] sm:$0xf] %vm338, %v336
        %340 = vrot.lane.b32.xlu0 %v314, 45
        %v341 = vpop.permute.xlu0 %340
        %vm343 = vcmask 1044456
        %344 = vst.msk [vmem:[#allocation2 + $0x8] sm:$0xf] %vm343, %v341
        %vm345 = vcmask 101376
        %346 = vst.msk [vmem:[#allocation2 + $0x10] sm:$0xf] %vm345, %v341
        %347 = vrot.lane.b32.xlu0 %v314, 47
        %v348 = vpop.permute.xlu0 %347
        %vm350 = vcmask 248952
        %351 = vst.msk [vmem:[#allocation2 + $0x10] sm:$0xf] %vm350, %v348
        %352 = vrot.lane.b32.xlu0 %v314, 49
        %v353 = vpop.permute.xlu0 %352
        %vm355 = vcmask 396552
        %356 = vst.msk [vmem:[#allocation2 + $0x10] sm:$0xf] %vm355, %v353
        %v357 = vld [vmem:[%s5] sm:$0x7]
        %v358 = vld [vmem:[#allocation2] sm:$0xff]
        %v359 = vld [vmem:[#allocation2 + $0x8] sm:$0xff]
        %v360 = vld [vmem:[#allocation2 + $0x10] sm:$0xff]
        %361 = vst [vmem:[#allocation4] sm:$0xff] %v358
        %362 = vst [vmem:[#allocation4 + $0x8] sm:$0xff] %v359
        %vm363 = vcmask 261120
        %364 = vst.msk [vmem:[#allocation4 + $0x10] sm:$0xff] %vm363, %v360
        %v365 = vld [vmem:[#allocation2] sm:$0xff]
        %v366 = vld [vmem:[#allocation2 + $0x8] sm:$0xff]
        %v367 = vld [vmem:[#allocation2 + $0x10] sm:$0xff]
        %371 = vrot.lane.b32.xlu0 %v365, 127
        %v372 = vpop.permute.xlu0 %371
        %373 = vrot.lane.b32.xlu0 %v366, 127
        %v374 = vpop.permute.xlu0 %373
        %375 = vrot.lane.b32.xlu0 %v367, 127
        %v376 = vpop.permute.xlu0 %375
        %vm377 = vcmask 1039360
        %v378 = vsel %vm377, %v372, %v374
        %v379 = vsel %vm377, %v374, %v376
        %383 = vst [vmem:[#allocation4 + $0x18] sm:$0xff] %v378
        %384 = vst [vmem:[#allocation4 + $0x20] sm:$0xff] %v379
        %385 = vst.msk [vmem:[#allocation4 + $0x28] sm:$0xff] %vm363, %v376
        %v386 = vld [vmem:[#allocation2] sm:$0xff]
        %v387 = vld [vmem:[#allocation2 + $0x8] sm:$0xff]
        %v388 = vld [vmem:[#allocation2 + $0x10] sm:$0xff]
        %392 = vrot.lane.b32.xlu0 %v386, 126
        %v393 = vpop.permute.xlu0 %392
        %394 = vrot.lane.b32.xlu0 %v387, 126
        %v395 = vpop.permute.xlu0 %394
        %396 = vrot.lane.b32.xlu0 %v388, 126
        %v397 = vpop.permute.xlu0 %396
        %vm398 = vcmask 1031168
        %v399 = vsel %vm398, %v393, %v395
        %v400 = vsel %vm398, %v395, %v397
        %404 = vst [vmem:[#allocation4 + $0x30] sm:$0xff] %v399
        %405 = vst [vmem:[#allocation4 + $0x38] sm:$0xff] %v400
        %406 = vst.msk [vmem:[#allocation4 + $0x40] sm:$0xff] %vm363, %v397
        %v407 = vld [vmem:[#allocation2] sm:$0xff]
        %v408 = vld [vmem:[#allocation2 + $0x8] sm:$0xff]
        %v409 = vld [vmem:[#allocation2 + $0x10] sm:$0xff]
        %413 = vrot.lane.b32.xlu0 %v407, 110
        %v414 = vpop.permute.xlu0 %413
        %415 = vrot.lane.b32.xlu0 %v408, 110
        %v416 = vpop.permute.xlu0 %415
        %417 = vrot.lane.b32.xlu0 %v409, 110
        %v418 = vpop.permute.xlu0 %417
        %vm419 = vcmask 900096
        %v420 = vsel %vm419, %v414, %v416
        %v421 = vsel %vm419, %v416, %v418
        %425 = vst [vmem:[#allocation4 + $0x48] sm:$0xff] %v420
        %426 = vst [vmem:[#allocation4 + $0x50] sm:$0xff] %v421
        %427 = vst.msk [vmem:[#allocation4 + $0x58] sm:$0xff] %vm363, %v418
        %v428 = vld [vmem:[#allocation2] sm:$0xff]
        %v429 = vld [vmem:[#allocation2 + $0x8] sm:$0xff]
        %v430 = vld [vmem:[#allocation2 + $0x10] sm:$0xff]
        %434 = vrot.lane.b32.xlu0 %v428, 109
        %v435 = vpop.permute.xlu0 %434
        %436 = vrot.lane.b32.xlu0 %v429, 109
        %v437 = vpop.permute.xlu0 %436
        %438 = vrot.lane.b32.xlu0 %v430, 109
        %v439 = vpop.permute.xlu0 %438
        %vm440 = vcmask 891904
        %v441 = vsel %vm440, %v435, %v437
        %v442 = vsel %vm440, %v437, %v439
        %446 = vst [vmem:[#allocation4 + $0x60] sm:$0xff] %v441
        %447 = vst [vmem:[#allocation4 + $0x68] sm:$0xff] %v442
        %448 = vst.msk [vmem:[#allocation4 + $0x70] sm:$0xff] %vm363, %v439
        %v449 = vld [vmem:[#allocation2] sm:$0xff]
        %v450 = vld [vmem:[#allocation2 + $0x8] sm:$0xff]
        %v451 = vld [vmem:[#allocation2 + $0x10] sm:$0xff]
        %455 = vrot.lane.b32.xlu0 %v449, 108
        %v456 = vpop.permute.xlu0 %455
        %457 = vrot.lane.b32.xlu0 %v450, 108
        %v458 = vpop.permute.xlu0 %457
        %459 = vrot.lane.b32.xlu0 %v451, 108
        %v460 = vpop.permute.xlu0 %459
        %vm461 = vcmask 883712
        %v462 = vsel %vm461, %v456, %v458
        %v463 = vsel %vm461, %v458, %v460
        %467 = vst [vmem:[#allocation4 + $0x78] sm:$0xff] %v462
        %468 = vst [vmem:[#allocation4 + $0x80] sm:$0xff] %v463
        %469 = vst.msk [vmem:[#allocation4 + $0x88] sm:$0xff] %vm363, %v460
        %v470 = vld [vmem:[#allocation2] sm:$0xff]
        %v471 = vld [vmem:[#allocation2 + $0x8] sm:$0xff]
        %v472 = vld [vmem:[#allocation2 + $0x10] sm:$0xff]
        %476 = vrot.lane.b32.xlu0 %v470, 92
        %v477 = vpop.permute.xlu0 %476
        %478 = vrot.lane.b32.xlu0 %v471, 92
        %v479 = vpop.permute.xlu0 %478
        %480 = vrot.lane.b32.xlu0 %v472, 92
        %v481 = vpop.permute.xlu0 %480
        %vm482 = vcmask 752640
        %v483 = vsel %vm482, %v477, %v479
        %v484 = vsel %vm482, %v479, %v481
        %488 = vst [vmem:[#allocation4 + $0x90] sm:$0xff] %v483
        %489 = vst [vmem:[#allocation4 + $0x98] sm:$0xff] %v484
        %490 = vst.msk [vmem:[#allocation4 + $0xa0] sm:$0xff] %vm363, %v481
        %v491 = vld [vmem:[#allocation2] sm:$0xff]
        %v492 = vld [vmem:[#allocation2 + $0x8] sm:$0xff]
        %v493 = vld [vmem:[#allocation2 + $0x10] sm:$0xff]
        %497 = vrot.lane.b32.xlu0 %v491, 91
        %v498 = vpop.permute.xlu0 %497
        %499 = vrot.lane.b32.xlu0 %v492, 91
        %v500 = vpop.permute.xlu0 %499
        %501 = vrot.lane.b32.xlu0 %v493, 91
        %v502 = vpop.permute.xlu0 %501
        %vm503 = vcmask 744448
        %v504 = vsel %vm503, %v498, %v500
        %v505 = vsel %vm503, %v500, %v502
        %509 = vst [vmem:[#allocation4 + $0xa8] sm:$0xff] %v504
        %510 = vst [vmem:[#allocation4 + $0xb0] sm:$0xff] %v505
        %511 = vst.msk [vmem:[#allocation4 + $0xb8] sm:$0xff] %vm363, %v502
        %v512 = vld [vmem:[#allocation2] sm:$0xff]
        %v513 = vld [vmem:[#allocation2 + $0x8] sm:$0xff]
        %v514 = vld [vmem:[#allocation2 + $0x10] sm:$0xff]
        %518 = vrot.lane.b32.xlu0 %v512, 90
        %v519 = vpop.permute.xlu0 %518
        %520 = vrot.lane.b32.xlu0 %v513, 90
        %v521 = vpop.permute.xlu0 %520
        %522 = vrot.lane.b32.xlu0 %v514, 90
        %v523 = vpop.permute.xlu0 %522
        %vm524 = vcmask 736256
        %v525 = vsel %vm524, %v519, %v521
        %v526 = vsel %vm524, %v521, %v523
        %530 = vst [vmem:[#allocation4 + $0xc0] sm:$0xff] %v525
        %531 = vst [vmem:[#allocation4 + $0xc8] sm:$0xff] %v526
        %532 = vst.msk [vmem:[#allocation4 + $0xd0] sm:$0xff] %vm363, %v523
        %v533 = vld [vmem:[#allocation5] sm:$0xff]
        %v534 = vld [vmem:[#allocation4] sm:$0xff]
        %v535 = vld [vmem:[#allocation4 + $0x8] sm:$0xff]
        %v536 = vld [vmem:[#allocation4 + $0x10] sm:$0xff]
        %v537 = vld [vmem:[#allocation4 + $0x18] sm:$0xff]
        %v538 = vld [vmem:[#allocation4 + $0x20] sm:$0xff]
        %v539 = vld [vmem:[#allocation4 + $0x28] sm:$0xff]
        %v540 = vld [vmem:[#allocation4 + $0x30] sm:$0xff]
        %v541 = vld [vmem:[#allocation4 + $0x38] sm:$0xff]
        %v542 = vld [vmem:[#allocation4 + $0x40] sm:$0xff]
        %v543 = vld [vmem:[#allocation4 + $0x48] sm:$0xff]
        %v544 = vld [vmem:[#allocation4 + $0x50] sm:$0xff]
        %v545 = vld [vmem:[#allocation4 + $0x58] sm:$0xff]
        %v546 = vld [vmem:[#allocation4 + $0x60] sm:$0xff]
        %v547 = vld [vmem:[#allocation4 + $0x68] sm:$0xff]
        %v548 = vld [vmem:[#allocation4 + $0x70] sm:$0xff]
        %v549 = vld [vmem:[#allocation4 + $0x78] sm:$0xff]
        %v550 = vld [vmem:[#allocation4 + $0x80] sm:$0xff]
        %v551 = vld [vmem:[#allocation4 + $0x88] sm:$0xff]
        %v552 = vld [vmem:[#allocation4 + $0x90] sm:$0xff]
        %v553 = vld [vmem:[#allocation4 + $0x98] sm:$0xff]
        %v554 = vld [vmem:[#allocation4 + $0xa0] sm:$0xff]
        %v555 = vld [vmem:[#allocation4 + $0xa8] sm:$0xff]
        %v556 = vld [vmem:[#allocation4 + $0xb0] sm:$0xff]
        %v557 = vld [vmem:[#allocation4 + $0xb8] sm:$0xff]
        %v558 = vld [vmem:[#allocation4 + $0xc0] sm:$0xff]
        %v559 = vld [vmem:[#allocation4 + $0xc8] sm:$0xff]
        %v560 = vld [vmem:[#allocation4 + $0xd0] sm:$0xff]
        %v561 = vld [vmem:[%s2] sm:$0xff]
        %563 = vset.pattern.permute.xlu0 0
        %564 = vperm.xlu0 %563, %v561
        %v565 = vpop.permute.xlu0 %564
        %vm567 = vcmask 588800
        %v569 = vsel %vm567, %v533, 0
        %571 = vmatprep.subr.mxu0 %v535
        %572 = vmatpush1.msra.mxu0 %v534
        %573 = vmatprep.subr.mxu0 %v538
        %574 = vmatpush1.msra.mxu0 %v537
        %575 = vmatprep.subr.mxu0 %v541
        %576 = vmatpush1.msra.mxu0 %v540
        %577 = vmatprep.subr.mxu0 %v544
        %578 = vmatpush1.msra.mxu0 %v543
        %579 = vmatprep.subr.mxu0 %v547
        %580 = vmatpush1.msra.mxu0 %v546
        %581 = vmatprep.subr.mxu0 %v550
        %582 = vmatpush1.msra.mxu0 %v549
        %583 = vmatprep.subr.mxu0 %v553
        %584 = vmatpush1.msra.mxu0 %v552
        %585 = vmatprep.subr.mxu0 %v556
        %586 = vmatpush1.msra.mxu0 %v555
        %587 = vmatprep.subr.mxu0 %v559
        %588 = vmatpush1.msra.mxu0 %v558
        %589 = vmatprep.subr.mxu0 0.0
        %590 = vmatpush1.msra.mxu0 0.0
        %591 = vmatprep.subr.mxu0 0.0
        %592 = vmatpush1.msra.mxu0 0.0
        %593 = vmatprep.subr.mxu0 0.0
        %594 = vmatpush1.msra.mxu0 0.0
        %595 = vmatprep.subr.mxu0 0.0
        %596 = vmatpush1.msra.mxu0 0.0
        %597 = vmatprep.subr.mxu0 0.0
        %598 = vmatpush1.msra.mxu0 0.0
        %599 = vmatprep.subr.mxu0 0.0
        %600 = vmatpush1.msra.mxu0 0.0
        %601 = vmatprep.subr.mxu0 0.0
        %602 = vmatpush1.msra.mxu0 0.0
        %603 = vmatprep.subr.mxu0 0.0
        %604 = vmatpush1.msra.mxu0 0.0
        %605 = vmatprep.subr.mxu0 0.0
        %606 = vmatpush1.msra.mxu0 0.0
        %607 = vmatprep.subr.mxu0 0.0
        %608 = vmatpush1.msra.mxu0 0.0
        %609 = vmatprep.subr.mxu0 0.0
        %610 = vmatpush1.msra.mxu0 0.0
        %611 = vmatprep.subr.mxu0 0.0
        %612 = vmatpush1.msra.mxu0 0.0
        %613 = vmatprep.subr.mxu0 0.0
        %614 = vmatpush1.msra.mxu0 0.0
        %615 = vmatprep.subr.mxu0 0.0
        %616 = vmatpush1.msra.mxu0 0.0
        %617 = vmatprep.subr.mxu0 0.0
        %618 = vmatpush1.msra.mxu0 0.0
        %619 = vmatprep.subr.mxu0 0.0
        %620 = vmatpush1.msra.mxu0 0.0
        %621 = vmatprep.subr.mxu0 0.0
        %622 = vmatpush1.msra.mxu0 0.0
        %623 = vmatprep.subr.mxu0 0.0
        %624 = vmatpush1.msra.mxu0 0.0
        %625 = vmatprep.subr.mxu0 0.0
        %626 = vmatpush1.msra.mxu0 0.0
        %627 = vmatprep.subr.mxu0 0.0
        %628 = vmatpush1.msra.mxu0 0.0
        %629 = vmatprep.subr.mxu0 0.0
        %630 = vmatpush1.msra.mxu0 0.0
        %631 = vmatprep.subr.mxu0 0.0
        %632 = vmatpush1.msra.mxu0 0.0
        %633 = vmatprep.subr.mxu0 0.0
        %634 = vmatpush1.msra.mxu0 0.0
        %635 = vmatprep.mubr.f32.mxu0 0.0
        %636 = vmatmul.mubr.f32.gmra.mrb[0].mxu0 %v569
        %v637 = vpop.f32.mrb[0].mxu0
        %v638 = vadd.f32 %v565, %v637
        %v639 = vpop.f32.mrb[0].mxu0
        %v640 = vadd.f32 %v565, %v639
        %641 = vdwg.mxu0
        %642 = vmatprep.subr.mxu0 0.0
        %643 = vmatpush1.msra.mxu0 %v536
        %644 = vmatprep.subr.mxu0 0.0
        %645 = vmatpush1.msra.mxu0 %v539
        %646 = vmatprep.subr.mxu0 0.0
        %647 = vmatpush1.msra.mxu0 %v542
        %648 = vmatprep.subr.mxu0 0.0
        %649 = vmatpush1.msra.mxu0 %v545
        %650 = vmatprep.subr.mxu0 0.0
        %651 = vmatpush1.msra.mxu0 %v548
        %652 = vmatprep.subr.mxu0 0.0
        %653 = vmatpush1.msra.mxu0 %v551
        %654 = vmatprep.subr.mxu0 0.0
        %655 = vmatpush1.msra.mxu0 %v554
        %656 = vmatprep.subr.mxu0 0.0
        %657 = vmatpush1.msra.mxu0 %v557
        %658 = vmatprep.subr.mxu0 0.0
        %659 = vmatpush1.msra.mxu0 %v560
        %660 = vmatprep.subr.mxu0 0.0
        %661 = vmatpush1.msra.mxu0 0.0
        %662 = vmatprep.subr.mxu0 0.0
        %663 = vmatpush1.msra.mxu0 0.0
        %664 = vmatprep.subr.mxu0 0.0
        %665 = vmatpush1.msra.mxu0 0.0
        %666 = vmatprep.subr.mxu0 0.0
        %667 = vmatpush1.msra.mxu0 0.0
        %668 = vmatprep.subr.mxu0 0.0
        %669 = vmatpush1.msra.mxu0 0.0
        %670 = vmatprep.subr.mxu0 0.0
        %671 = vmatpush1.msra.mxu0 0.0
        %672 = vmatprep.subr.mxu0 0.0
        %673 = vmatpush1.msra.mxu0 0.0
        %674 = vmatprep.subr.mxu0 0.0
        %675 = vmatpush1.msra.mxu0 0.0
        %676 = vmatprep.subr.mxu0 0.0
        %677 = vmatpush1.msra.mxu0 0.0
        %678 = vmatprep.subr.mxu0 0.0
        %679 = vmatpush1.msra.mxu0 0.0
        %680 = vmatprep.subr.mxu0 0.0
        %681 = vmatpush1.msra.mxu0 0.0
        %682 = vmatprep.subr.mxu0 0.0
        %683 = vmatpush1.msra.mxu0 0.0
        %684 = vmatprep.subr.mxu0 0.0
        %685 = vmatpush1.msra.mxu0 0.0
        %686 = vmatprep.subr.mxu0 0.0
        %687 = vmatpush1.msra.mxu0 0.0
        %688 = vmatprep.subr.mxu0 0.0
        %689 = vmatpush1.msra.mxu0 0.0
        %690 = vmatprep.subr.mxu0 0.0
        %691 = vmatpush1.msra.mxu0 0.0
        %692 = vmatprep.subr.mxu0 0.0
        %693 = vmatpush1.msra.mxu0 0.0
        %694 = vmatprep.subr.mxu0 0.0
        %695 = vmatpush1.msra.mxu0 0.0
        %696 = vmatprep.subr.mxu0 0.0
        %697 = vmatpush1.msra.mxu0 0.0
        %698 = vmatprep.subr.mxu0 0.0
        %699 = vmatpush1.msra.mxu0 0.0
        %700 = vmatprep.subr.mxu0 0.0
        %701 = vmatpush1.msra.mxu0 0.0
        %702 = vmatprep.subr.mxu0 0.0
        %703 = vmatpush1.msra.mxu0 0.0
        %704 = vmatprep.subr.mxu0 0.0
        %705 = vmatpush1.msra.mxu0 0.0
        %706 = vmatprep.mubr.f32.mxu0 0.0
        %707 = vmatmul.mubr.f32.gmra.mrb[0].mxu0 %v569
        %v708 = vpop.f32.mrb[0].mxu0
        %v709 = vadd.f32 %v565, %v708
        %v710 = vpop.f32.mrb[0].mxu0
        %711 = vdwg.mxu0
        %v712 = vmax.f32 %v638, 0.0
        %v713 = vmax.f32 %v640, 0.0
        %v714 = vmax.f32 %v709, 0.0
        %v716 = vlaneseq
        %v717 = vshrl.u32 %v716, 7
        %v718 = vsub.s32 0, %v717
        %v719 = vrot.slane %v357, %v718
        %v720 = vlaneseq
        %v721 = vshrl.u32 %v720, 7
        %v722 = vsub.s32 1, %v721
        %v723 = vrot.slane %v357, %v722
        %v724 = vlaneseq
        %v725 = vshrl.u32 %v724, 7
        %v726 = vsub.s32 2, %v725
        %v727 = vrot.slane %v357, %v726
        %v731 = vmul.f32 %v712, %v719
        %v732 = vmul.f32 %v713, %v723
        %v733 = vmul.f32 %v714, %v727
        %737 = vrot.lane.b32.xlu0 %v731, 19
        %v738 = vpop.permute.xlu0 %737
        %739 = vrot.lane.b32.xlu0 %v732, 19
        %v740 = vpop.permute.xlu0 %739
        %741 = vrot.lane.b32.xlu0 %v733, 19
        %v742 = vpop.permute.xlu0 %741
        %vm743 = vcmask 154624
        %v744 = vsel %vm743, %v738, %v740
        %v745 = vsel %vm743, %v740, %v742
        %vm749 = vcmask 1047704
        %750 = vst.msk [vmem:[#allocation3] sm:$0xff] %vm749, %v738
        %751 = vst [vmem:[#allocation3 + $0x8] sm:$0xff] %v744
        %vm752 = vcmask 416768
        %753 = vst.msk [vmem:[#allocation3 + $0x10] sm:$0xff] %vm752, %v745
        %v754 = vld [vmem:[#allocation3] sm:$0xff]
        %v755 = vld [vmem:[#allocation3 + $0x8] sm:$0xff]
        %v756 = vld [vmem:[#allocation3 + $0x10] sm:$0xff]
        %757 = vst [vmem:[#allocation4] sm:$0xff] %v754
        %758 = vst [vmem:[#allocation4 + $0x8] sm:$0xff] %v755
        %759 = vst.msk [vmem:[#allocation4 + $0x10] sm:$0xff] %vm363, %v756
        %v760 = vld [vmem:[#allocation3] sm:$0xff]
        %v761 = vld [vmem:[#allocation3 + $0x8] sm:$0xff]
        %v762 = vld [vmem:[#allocation3 + $0x10] sm:$0xff]
        %766 = vrot.lane.b32.xlu0 %v760, 127
        %v767 = vpop.permute.xlu0 %766
        %768 = vrot.lane.b32.xlu0 %v761, 127
        %v769 = vpop.permute.xlu0 %768
        %770 = vrot.lane.b32.xlu0 %v762, 127
        %v771 = vpop.permute.xlu0 %770
        %v772 = vsel %vm377, %v767, %v769
        %v773 = vsel %vm377, %v769, %v771
        %777 = vst [vmem:[#allocation4 + $0x18] sm:$0xff] %v772
        %778 = vst [vmem:[#allocation4 + $0x20] sm:$0xff] %v773
        %779 = vst.msk [vmem:[#allocation4 + $0x28] sm:$0xff] %vm363, %v771
        %v780 = vld [vmem:[#allocation3] sm:$0xff]
        %v781 = vld [vmem:[#allocation3 + $0x8] sm:$0xff]
        %v782 = vld [vmem:[#allocation3 + $0x10] sm:$0xff]
        %786 = vrot.lane.b32.xlu0 %v780, 126
        %v787 = vpop.permute.xlu0 %786
        %788 = vrot.lane.b32.xlu0 %v781, 126
        %v789 = vpop.permute.xlu0 %788
        %790 = vrot.lane.b32.xlu0 %v782, 126
        %v791 = vpop.permute.xlu0 %790
        %v792 = vsel %vm398, %v787, %v789
        %v793 = vsel %vm398, %v789, %v791
        %797 = vst [vmem:[#allocation4 + $0x30] sm:$0xff] %v792
        %798 = vst [vmem:[#allocation4 + $0x38] sm:$0xff] %v793
        %799 = vst.msk [vmem:[#allocation4 + $0x40] sm:$0xff] %vm363, %v791
        %v800 = vld [vmem:[#allocation3] sm:$0xff]
        %v801 = vld [vmem:[#allocation3 + $0x8] sm:$0xff]
        %v802 = vld [vmem:[#allocation3 + $0x10] sm:$0xff]
        %806 = vrot.lane.b32.xlu0 %v800, 110
        %v807 = vpop.permute.xlu0 %806
        %808 = vrot.lane.b32.xlu0 %v801, 110
        %v809 = vpop.permute.xlu0 %808
        %810 = vrot.lane.b32.xlu0 %v802, 110
        %v811 = vpop.permute.xlu0 %810
        %v812 = vsel %vm419, %v807, %v809
        %v813 = vsel %vm419, %v809, %v811
        %817 = vst [vmem:[#allocation4 + $0x48] sm:$0xff] %v812
        %818 = vst [vmem:[#allocation4 + $0x50] sm:$0xff] %v813
        %819 = vst.msk [vmem:[#allocation4 + $0x58] sm:$0xff] %vm363, %v811
        %v820 = vld [vmem:[#allocation3] sm:$0xff]
        %v821 = vld [vmem:[#allocation3 + $0x8] sm:$0xff]
        %v822 = vld [vmem:[#allocation3 + $0x10] sm:$0xff]
        %826 = vrot.lane.b32.xlu0 %v820, 109
        %v827 = vpop.permute.xlu0 %826
        %828 = vrot.lane.b32.xlu0 %v821, 109
        %v829 = vpop.permute.xlu0 %828
        %830 = vrot.lane.b32.xlu0 %v822, 109
        %v831 = vpop.permute.xlu0 %830
        %v832 = vsel %vm440, %v827, %v829
        %v833 = vsel %vm440, %v829, %v831
        %837 = vst [vmem:[#allocation4 + $0x60] sm:$0xff] %v832
        %838 = vst [vmem:[#allocation4 + $0x68] sm:$0xff] %v833
        %839 = vst.msk [vmem:[#allocation4 + $0x70] sm:$0xff] %vm363, %v831
        %v840 = vld [vmem:[#allocation3] sm:$0xff]
        %v841 = vld [vmem:[#allocation3 + $0x8] sm:$0xff]
        %v842 = vld [vmem:[#allocation3 + $0x10] sm:$0xff]
        %846 = vrot.lane.b32.xlu0 %v840, 108
        %v847 = vpop.permute.xlu0 %846
        %848 = vrot.lane.b32.xlu0 %v841, 108
        %v849 = vpop.permute.xlu0 %848
        %850 = vrot.lane.b32.xlu0 %v842, 108
        %v851 = vpop.permute.xlu0 %850
        %v852 = vsel %vm461, %v847, %v849
        %v853 = vsel %vm461, %v849, %v851
        %857 = vst [vmem:[#allocation4 + $0x78] sm:$0xff] %v852
        %858 = vst [vmem:[#allocation4 + $0x80] sm:$0xff] %v853
        %859 = vst.msk [vmem:[#allocation4 + $0x88] sm:$0xff] %vm363, %v851
        %v860 = vld [vmem:[#allocation3] sm:$0xff]
        %v861 = vld [vmem:[#allocation3 + $0x8] sm:$0xff]
        %v862 = vld [vmem:[#allocation3 + $0x10] sm:$0xff]
        %866 = vrot.lane.b32.xlu0 %v860, 92
        %v867 = vpop.permute.xlu0 %866
        %868 = vrot.lane.b32.xlu0 %v861, 92
        %v869 = vpop.permute.xlu0 %868
        %870 = vrot.lane.b32.xlu0 %v862, 92
        %v871 = vpop.permute.xlu0 %870
        %v872 = vsel %vm482, %v867, %v869
        %v873 = vsel %vm482, %v869, %v871
        %877 = vst [vmem:[#allocation4 + $0x90] sm:$0xff] %v872
        %878 = vst [vmem:[#allocation4 + $0x98] sm:$0xff] %v873
        %879 = vst.msk [vmem:[#allocation4 + $0xa0] sm:$0xff] %vm363, %v871
        %v880 = vld [vmem:[#allocation3] sm:$0xff]
        %v881 = vld [vmem:[#allocation3 + $0x8] sm:$0xff]
        %v882 = vld [vmem:[#allocation3 + $0x10] sm:$0xff]
        %886 = vrot.lane.b32.xlu0 %v880, 91
        %v887 = vpop.permute.xlu0 %886
        %888 = vrot.lane.b32.xlu0 %v881, 91
        %v889 = vpop.permute.xlu0 %888
        %890 = vrot.lane.b32.xlu0 %v882, 91
        %v891 = vpop.permute.xlu0 %890
        %v892 = vsel %vm503, %v887, %v889
        %v893 = vsel %vm503, %v889, %v891
        %897 = vst [vmem:[#allocation4 + $0xa8] sm:$0xff] %v892
        %898 = vst [vmem:[#allocation4 + $0xb0] sm:$0xff] %v893
        %899 = vst.msk [vmem:[#allocation4 + $0xb8] sm:$0xff] %vm363, %v891
        %v900 = vld [vmem:[#allocation3] sm:$0xff]
        %v901 = vld [vmem:[#allocation3 + $0x8] sm:$0xff]
        %v902 = vld [vmem:[#allocation3 + $0x10] sm:$0xff]
        %906 = vrot.lane.b32.xlu0 %v900, 90
        %v907 = vpop.permute.xlu0 %906
        %908 = vrot.lane.b32.xlu0 %v901, 90
        %v909 = vpop.permute.xlu0 %908
        %910 = vrot.lane.b32.xlu0 %v902, 90
        %v911 = vpop.permute.xlu0 %910
        %v912 = vsel %vm524, %v907, %v909
        %v913 = vsel %vm524, %v909, %v911
        %917 = vst [vmem:[#allocation4 + $0xc0] sm:$0xff] %v912
        %918 = vst [vmem:[#allocation4 + $0xc8] sm:$0xff] %v913
        %919 = vst.msk [vmem:[#allocation4 + $0xd0] sm:$0xff] %vm363, %v911
        %v920 = vld [vmem:[%s3] sm:$0xff]
        %v921 = vld [vmem:[#allocation4] sm:$0xff]
        %v922 = vld [vmem:[#allocation4 + $0x8] sm:$0xff]
        %v923 = vld [vmem:[#allocation4 + $0x10] sm:$0xff]
        %v924 = vld [vmem:[#allocation4 + $0x18] sm:$0xff]
        %v925 = vld [vmem:[#allocation4 + $0x20] sm:$0xff]
        %v926 = vld [vmem:[#allocation4 + $0x28] sm:$0xff]
        %v927 = vld [vmem:[#allocation4 + $0x30] sm:$0xff]
        %v928 = vld [vmem:[#allocation4 + $0x38] sm:$0xff]
        %v929 = vld [vmem:[#allocation4 + $0x40] sm:$0xff]
        %v930 = vld [vmem:[#allocation4 + $0x48] sm:$0xff]
        %v931 = vld [vmem:[#allocation4 + $0x50] sm:$0xff]
        %v932 = vld [vmem:[#allocation4 + $0x58] sm:$0xff]
        %v933 = vld [vmem:[#allocation4 + $0x60] sm:$0xff]
        %v934 = vld [vmem:[#allocation4 + $0x68] sm:$0xff]
        %v935 = vld [vmem:[#allocation4 + $0x70] sm:$0xff]
        %v936 = vld [vmem:[#allocation4 + $0x78] sm:$0xff]
        %v937 = vld [vmem:[#allocation4 + $0x80] sm:$0xff]
        %v938 = vld [vmem:[#allocation4 + $0x88] sm:$0xff]
        %v939 = vld [vmem:[#allocation4 + $0x90] sm:$0xff]
        %v940 = vld [vmem:[#allocation4 + $0x98] sm:$0xff]
        %v941 = vld [vmem:[#allocation4 + $0xa0] sm:$0xff]
        %v942 = vld [vmem:[#allocation4 + $0xa8] sm:$0xff]
        %v943 = vld [vmem:[#allocation4 + $0xb0] sm:$0xff]
        %v944 = vld [vmem:[#allocation4 + $0xb8] sm:$0xff]
        %v945 = vld [vmem:[#allocation4 + $0xc0] sm:$0xff]
        %v946 = vld [vmem:[#allocation4 + $0xc8] sm:$0xff]
        %v947 = vld [vmem:[#allocation4 + $0xd0] sm:$0xff]
        %v948 = vld [vmem:[%s4] sm:$0xff]
        %950 = vset.pattern.permute.xlu0 0
        %951 = vperm.xlu0 %950, %v948
        %v952 = vpop.permute.xlu0 %951
        %v955 = vsel %vm567, %v920, 0
        %957 = vmatprep.subr.mxu0 %v922
        %958 = vmatpush1.msra.mxu0 %v921
        %959 = vmatprep.subr.mxu0 %v925
        %960 = vmatpush1.msra.mxu0 %v924
        %961 = vmatprep.subr.mxu0 %v928
        %962 = vmatpush1.msra.mxu0 %v927
        %963 = vmatprep.subr.mxu0 %v931
        %964 = vmatpush1.msra.mxu0 %v930
        %965 = vmatprep.subr.mxu0 %v934
        %966 = vmatpush1.msra.mxu0 %v933
        %967 = vmatprep.subr.mxu0 %v937
        %968 = vmatpush1.msra.mxu0 %v936
        %969 = vmatprep.subr.mxu0 %v940
        %970 = vmatpush1.msra.mxu0 %v939
        %971 = vmatprep.subr.mxu0 %v943
        %972 = vmatpush1.msra.mxu0 %v942
        %973 = vmatprep.subr.mxu0 %v946
        %974 = vmatpush1.msra.mxu0 %v945
        %975 = vmatprep.subr.mxu0 0.0
        %976 = vmatpush1.msra.mxu0 0.0
        %977 = vmatprep.subr.mxu0 0.0
        %978 = vmatpush1.msra.mxu0 0.0
        %979 = vmatprep.subr.mxu0 0.0
        %980 = vmatpush1.msra.mxu0 0.0
        %981 = vmatprep.subr.mxu0 0.0
        %982 = vmatpush1.msra.mxu0 0.0
        %983 = vmatprep.subr.mxu0 0.0
        %984 = vmatpush1.msra.mxu0 0.0
        %985 = vmatprep.subr.mxu0 0.0
        %986 = vmatpush1.msra.mxu0 0.0
        %987 = vmatprep.subr.mxu0 0.0
        %988 = vmatpush1.msra.mxu0 0.0
        %989 = vmatprep.subr.mxu0 0.0
        %990 = vmatpush1.msra.mxu0 0.0
        %991 = vmatprep.subr.mxu0 0.0
        %992 = vmatpush1.msra.mxu0 0.0
        %993 = vmatprep.subr.mxu0 0.0
        %994 = vmatpush1.msra.mxu0 0.0
        %995 = vmatprep.subr.mxu0 0.0
        %996 = vmatpush1.msra.mxu0 0.0
        %997 = vmatprep.subr.mxu0 0.0
        %998 = vmatpush1.msra.mxu0 0.0
        %999 = vmatprep.subr.mxu0 0.0
        %1000 = vmatpush1.msra.mxu0 0.0
        %1001 = vmatprep.subr.mxu0 0.0
        %1002 = vmatpush1.msra.mxu0 0.0
        %1003 = vmatprep.subr.mxu0 0.0
        %1004 = vmatpush1.msra.mxu0 0.0
        %1005 = vmatprep.subr.mxu0 0.0
        %1006 = vmatpush1.msra.mxu0 0.0
        %1007 = vmatprep.subr.mxu0 0.0
        %1008 = vmatpush1.msra.mxu0 0.0
        %1009 = vmatprep.subr.mxu0 0.0
        %1010 = vmatpush1.msra.mxu0 0.0
        %1011 = vmatprep.subr.mxu0 0.0
        %1012 = vmatpush1.msra.mxu0 0.0
        %1013 = vmatprep.subr.mxu0 0.0
        %1014 = vmatpush1.msra.mxu0 0.0
        %1015 = vmatprep.subr.mxu0 0.0
        %1016 = vmatpush1.msra.mxu0 0.0
        %1017 = vmatprep.subr.mxu0 0.0
        %1018 = vmatpush1.msra.mxu0 0.0
        %1019 = vmatprep.subr.mxu0 0.0
        %1020 = vmatpush1.msra.mxu0 0.0
        %1021 = vmatprep.mubr.f32.mxu0 0.0
        %1022 = vmatmul.mubr.f32.gmra.mrb[0].mxu0 %v955
        %v1023 = vpop.f32.mrb[0].mxu0
        %v1024 = vadd.f32 %v952, %v1023
        %v1025 = vpop.f32.mrb[0].mxu0
        %v1026 = vadd.f32 %v952, %v1025
        %1027 = vdwg.mxu0
        %1028 = vmatprep.subr.mxu0 0.0
        %1029 = vmatpush1.msra.mxu0 %v923
        %1030 = vmatprep.subr.mxu0 0.0
        %1031 = vmatpush1.msra.mxu0 %v926
        %1032 = vmatprep.subr.mxu0 0.0
        %1033 = vmatpush1.msra.mxu0 %v929
        %1034 = vmatprep.subr.mxu0 0.0
        %1035 = vmatpush1.msra.mxu0 %v932
        %1036 = vmatprep.subr.mxu0 0.0
        %1037 = vmatpush1.msra.mxu0 %v935
        %1038 = vmatprep.subr.mxu0 0.0
        %1039 = vmatpush1.msra.mxu0 %v938
        %1040 = vmatprep.subr.mxu0 0.0
        %1041 = vmatpush1.msra.mxu0 %v941
        %1042 = vmatprep.subr.mxu0 0.0
        %1043 = vmatpush1.msra.mxu0 %v944
        %1044 = vmatprep.subr.mxu0 0.0
        %1045 = vmatpush1.msra.mxu0 %v947
        %1046 = vmatprep.subr.mxu0 0.0
        %1047 = vmatpush1.msra.mxu0 0.0
        %1048 = vmatprep.subr.mxu0 0.0
        %1049 = vmatpush1.msra.mxu0 0.0
        %1050 = vmatprep.subr.mxu0 0.0
        %1051 = vmatpush1.msra.mxu0 0.0
        %1052 = vmatprep.subr.mxu0 0.0
        %1053 = vmatpush1.msra.mxu0 0.0
        %1054 = vmatprep.subr.mxu0 0.0
        %1055 = vmatpush1.msra.mxu0 0.0
        %1056 = vmatprep.subr.mxu0 0.0
        %1057 = vmatpush1.msra.mxu0 0.0
        %1058 = vmatprep.subr.mxu0 0.0
        %1059 = vmatpush1.msra.mxu0 0.0
        %1060 = vmatprep.subr.mxu0 0.0
        %1061 = vmatpush1.msra.mxu0 0.0
        %1062 = vmatprep.subr.mxu0 0.0
        %1063 = vmatpush1.msra.mxu0 0.0
        %1064 = vmatprep.subr.mxu0 0.0
        %1065 = vmatpush1.msra.mxu0 0.0
        %1066 = vmatprep.subr.mxu0 0.0
        %1067 = vmatpush1.msra.mxu0 0.0
        %1068 = vmatprep.subr.mxu0 0.0
        %1069 = vmatpush1.msra.mxu0 0.0
        %1070 = vmatprep.subr.mxu0 0.0
        %1071 = vmatpush1.msra.mxu0 0.0
        %1072 = vmatprep.subr.mxu0 0.0
        %1073 = vmatpush1.msra.mxu0 0.0
        %1074 = vmatprep.subr.mxu0 0.0
        %1075 = vmatpush1.msra.mxu0 0.0
        %1076 = vmatprep.subr.mxu0 0.0
        %1077 = vmatpush1.msra.mxu0 0.0
        %1078 = vmatprep.subr.mxu0 0.0
        %1079 = vmatpush1.msra.mxu0 0.0
        %1080 = vmatprep.subr.mxu0 0.0
        %1081 = vmatpush1.msra.mxu0 0.0
        %1082 = vmatprep.subr.mxu0 0.0
        %1083 = vmatpush1.msra.mxu0 0.0
        %1084 = vmatprep.subr.mxu0 0.0
        %1085 = vmatpush1.msra.mxu0 0.0
        %1086 = vmatprep.subr.mxu0 0.0
        %1087 = vmatpush1.msra.mxu0 0.0
        %1088 = vmatprep.subr.mxu0 0.0
        %1089 = vmatpush1.msra.mxu0 0.0
        %1090 = vmatprep.subr.mxu0 0.0
        %1091 = vmatpush1.msra.mxu0 0.0
        %1092 = vmatprep.mubr.f32.mxu0 0.0
        %1093 = vmatmul.mubr.f32.gmra.mrb[0].mxu0 %v955
        %v1094 = vpop.f32.mrb[0].mxu0
        %v1095 = vadd.f32 %v952, %v1094
        %v1096 = vpop.f32.mrb[0].mxu0
        %1097 = vdwg.mxu0
        %v1098 = vmax.f32 %v1024, 0.0
        %v1099 = vmax.f32 %v1026, 0.0
        %v1100 = vmax.f32 %v1095, 0.0
        %vm1101 = vcmask 130048
        %1102 = vst.msk [vmem:[%s257] sm:$0xff] %vm1101, %v1098
        %1104 = vrot.lane.b32.xlu0 %v1098, 126
        %v1105 = vpop.permute.xlu0 %1104
        %vm1107 = vcmask 261248
        %1108 = vst.msk [vmem:[%s257] sm:$0xff] %vm1107, %v1105
        %1109 = vrot.lane.b32.xlu0 %v1098, 124
        %v1110 = vpop.permute.xlu0 %1109
        %vm1112 = vcmask 392448
        %1113 = vst.msk [vmem:[%s257] sm:$0xff] %vm1112, %v1110
        %1114 = vrot.lane.b32.xlu0 %v1098, 122
        %v1115 = vpop.permute.xlu0 %1114
        %vm1117 = vcmask 523648
        %1118 = vst.msk [vmem:[%s257] sm:$0xff] %vm1117, %v1115
        %1119 = vrot.lane.b32.xlu0 %v1098, 120
        %v1120 = vpop.permute.xlu0 %1119
        %vm1122 = vcmask 654848
        %1123 = vst.msk [vmem:[%s257] sm:$0xff] %vm1122, %v1120
        %1124 = vrot.lane.b32.xlu0 %v1098, 118
        %v1125 = vpop.permute.xlu0 %1124
        %vm1127 = vcmask 786048
        %1128 = vst.msk [vmem:[%s257] sm:$0xff] %vm1127, %v1125
        %1129 = vrot.lane.b32.xlu0 %v1098, 116
        %v1130 = vpop.permute.xlu0 %1129
        %vm1132 = vcmask 917248
        %1133 = vst.msk [vmem:[%s257] sm:$0xff] %vm1132, %v1130
        %1135 = vrot.lane.b32.xlu0 %v1098, 114
        %v1136 = vpop.permute.xlu0 %1135
        %1137 = vrot.lane.b32.xlu0 %v1099, 114
        %v1138 = vpop.permute.xlu0 %1137
        %vm1139 = vcmask 932864
        %v1140 = vsel %vm1139, %v1136, %v1138
        %vm1142 = vcmask 1048448
        %1143 = vst.msk [vmem:[%s257] sm:$0xff] %vm1142, %v1140
        %1144 = vrot.lane.b32.xlu0 %v1099, 112
        %v1145 = vpop.permute.xlu0 %1144
        %1147 = vst.msk [vmem:[%s257 + $0x8] sm:$0xff] %vm1101, %v1145
        %1148 = vrot.lane.b32.xlu0 %v1099, 110
        %v1149 = vpop.permute.xlu0 %1148
        %1151 = vst.msk [vmem:[%s257 + $0x8] sm:$0xff] %vm1107, %v1149
        %1152 = vrot.lane.b32.xlu0 %v1099, 108
        %v1153 = vpop.permute.xlu0 %1152
        %1155 = vst.msk [vmem:[%s257 + $0x8] sm:$0xff] %vm1112, %v1153
        %1156 = vrot.lane.b32.xlu0 %v1099, 106
        %v1157 = vpop.permute.xlu0 %1156
        %1159 = vst.msk [vmem:[%s257 + $0x8] sm:$0xff] %vm1117, %v1157
        %1160 = vrot.lane.b32.xlu0 %v1099, 104
        %v1161 = vpop.permute.xlu0 %1160
        %1163 = vst.msk [vmem:[%s257 + $0x8] sm:$0xff] %vm1122, %v1161
        %1164 = vrot.lane.b32.xlu0 %v1099, 102
        %v1165 = vpop.permute.xlu0 %1164
        %1167 = vst.msk [vmem:[%s257 + $0x8] sm:$0xff] %vm1127, %v1165
        %1169 = vrot.lane.b32.xlu0 %v1099, 100
        %v1170 = vpop.permute.xlu0 %1169
        %1171 = vrot.lane.b32.xlu0 %v1100, 100
        %v1172 = vpop.permute.xlu0 %1171
        %vm1173 = vcmask 818176
        %v1174 = vsel %vm1173, %v1170, %v1172
        %1176 = vst.msk [vmem:[%s257 + $0x8] sm:$0xff] %vm1132, %v1174
        %1177 = vrot.lane.b32.xlu0 %v1100, 98
        %v1178 = vpop.permute.xlu0 %1177
        %1180 = vst.msk [vmem:[%s257 + $0x8] sm:$0xff] %vm1142, %v1178
        %s1181 = sand.u32 %s160, 1
        %s1182 = scalar_lea.sflag [#allocation7], %s1181
        %s1183 = sand.u32 %s160, 1
        %s1184 = smul.addr %s1183, 16
        %s1185 = scalar_lea.vmem [#allocation8], %s1184
        // Predicated region
        $region49: #{tpu_custom_call.1} parent=43 // pred_check
          %p1186 = pneg %p170
        $region50: #{tpu_custom_call.1} parent=43 // pred_check_branch
          %1188 = sbr.rel (%p1186) target = $region52
        $region51: #{tpu_custom_call.1} parent=43 // pred_region
          %s1190 = ssub.s32 256, 256
          %1191 = vsyncadd %s1182, %s1190
          %s1192 = smul.addr %s21, 2
          %s1193 = smul.addr %s1192, 128
          %s1194 = scalar_lea.hbm %s6, %s1193
          %s1196 = sshll.u32 %s1185, 4
          %s1197 = int_to_ptr.vmem [resolvable:$true] %s1196
          %1199 = dma.vmem_to_hbm [thread:$0]  %s1197, 256, %s1194, %s1182
        $region52: #{tpu_custom_call.1} parent=43 // pred_fallthru
          _
      $region44: #{tpu_custom_call.1} parent=5 // pred_fallthru
        _
      %p1200 = scmp.le.s32.totalorder 2, %s16
      // Predicated region
      $region53: #{tpu_custom_call.1} parent=5 // pred_check
        %p1201 = pneg %p1200
      $region54: #{tpu_custom_call.1} parent=5 // pred_check_branch
        %1203 = sbr.rel (%p1201) target = $region56
      $region55: #{tpu_custom_call.1} parent=5 // pred_region
        %s1204 = ssub.s32 %s16, 2
        // Predicated region
        $region57: #{tpu_custom_call.1} parent=55 // pred_check
          %p1205 = pneg %p176
        $region58: #{tpu_custom_call.1} parent=55 // pred_check_branch
          %1207 = sbr.rel (%p1205) target = $region60
        $region59: #{tpu_custom_call.1} parent=55 // pred_region
          %s1208 = sand.u32 %s161, 1
          %s1209 = scalar_lea.sflag [#allocation7], %s1208
          %s1210 = sand.u32 %s161, 1
          %s1211 = smul.addr %s1210, 16
          %s1212 = scalar_lea.vmem [#allocation8], %s1211
          %1213 = dma.done %s1209, 256
        $region60: #{tpu_custom_call.1} parent=55 // pred_fallthru
          _
      $region56: #{tpu_custom_call.1} parent=5 // pred_fallthru
        _
    $region6: #{tpu_custom_call.1} parent=1 // loop_footer
      %s20 = sadd.s32 1, %s16
    $region7: #{tpu_custom_call.1} parent=1 // loop_footer_branch
      %15 = sbr.rel target = $region3
    $region8: #{tpu_custom_call.1} parent=1 // loop_exit
      _
    %1214 = vsyncpa [#allocation6], 1
    %s1215 = scalar_lea.sflag [#allocation6], 1
    %1216 = vsyncpa %s1215, 1
    %1217 = vsyncpa [#allocation7], 1
    %s1218 = scalar_lea.sflag [#allocation7], 1
    %1219 = vsyncpa %s1218, 1

</llo_original>
